<compile_context>
chip_gen: v7x
topology: tpu7x:2x2x1
jax: 0.10.0
libtpu: 0.0.40
codegen_flags: <defaults>
</compile_context>

<pallas_src>
import functools

import jax
import jax.numpy as jnp
from jax import lax
from jax.experimental import pallas as pl
from jax.experimental.pallas import tpu as pltpu


# ----------------------------------------------------------------------------
# Pallas kernel: fused bidirectional LSTM recurrence + final fc/tanh in VMEM.
# ----------------------------------------------------------------------------
def _encoder_kernel(x_ref,      # (1, S*B, E) bf16  batch-block input, rows time-major
                    wih_ref,    # (E, 8H)     bf16  [wih_fwd | wih_bwd]
                    whh_ref,    # (H, 8H)     f32   [whh_fwd | whh_bwd]
                    b_ref,      # (1, 8H)     f32   fused biases (b_ih + b_hh, both dirs)
                    fcw_ref,    # (2H, D)     bf16
                    fcb_ref,    # (1, D)      f32
                    out_f_ref,  # (S, B, H)   f32   forward outputs
                    out_b_ref,  # (S, B, H)   f32   backward outputs
                    hid_ref,    # (1, B, D)   f32
                    cell_ref,   # (1, B, D)   f32
                    xp_ref):    # (S, B, 8H)  f32   scratch: precomputed gate inputs
    S, B, H = out_f_ref.shape
    G = 4 * H

    # (kept) Both directions' input projections in ONE MXU matmul, biases folded.
    # The (S*B, 8H) -> (S, B, 8H) reshape is a pure re-tiling (f32, B multiple of 8),
    # giving tile-aligned leading-axis reads per step (R3).
    proj = (jnp.dot(x_ref[0], wih_ref[...], preferred_element_type=jnp.float32)
            + b_ref[...])
    xp_ref[...] = proj.reshape(S, B, 2 * G)

    whh = whh_ref[...]        # (H, 8H) f32: no per-step operand pack on the chain (v5e)

    def step(t, carry):
        h, c = carry          # stacked (2B, H): rows 0:B forward, rows B:2B backward
        tb = S - 1 - t

        # (R1) one recurrent matmul per step; only the diagonal blocks of the result
        # are used (cheaper than block-diag W_hh + per-step lane concat).
        hh = jnp.dot(h, whh, preferred_element_type=jnp.float32)          # (2B, 8H)
        gates = jnp.concatenate(
            [xp_ref[t][:, 0:G] + hh[0:B, 0:G],                # fwd gates at time t
             xp_ref[tb][:, G:2 * G] + hh[B:2 * B, G:2 * G]],  # bwd gates at time S-1-t
            axis=0)                                                        # (2B, 4H)

        # (R6) full-width activations (no sub-lane masking before the EUP); PyTorch
        # gate order [i, f, g, o].
        sg = jax.nn.sigmoid(gates)
        tg = jnp.tanh(gates)
        c_new = sg[:, H:2 * H] * c + sg[:, 0:H] * tg[:, 2 * H:3 * H]
        h_new = sg[:, 3 * H:4 * H] * jnp.tanh(c_new)

        # (R5) lane-offset-0, per-direction stores; the 2H concat happens in the wrapper.
        out_f_ref[t] = h_new[0:B]
        out_b_ref[tb] = h_new[B:2 * B]
        return h_new, c_new

    z = jnp.zeros((2 * B, H), jnp.float32)
    # Short, static, serial loop: fully unrolled for cross-iteration ILP (S is small).
    h, c = lax.fori_loop(0, S, step, (z, z), unroll=True)

    # hidden = tanh(fc(cat(h_fwd, h_bwd))); same fc applied to the cell state — one
    # (2B, 2H) matmul.  Off the critical path.
    hc = jnp.concatenate(
        [jnp.concatenate([h[0:B], h[B:2 * B]], axis=1),
         jnp.concatenate([c[0:B], c[B:2 * B]], axis=1)], axis=0).astype(fcw_ref.dtype)
    res = jnp.tanh(jnp.dot(hc, fcw_ref[...], preferred_element_type=jnp.float32)
                   + fcb_ref[...])
    hid_ref[0] = res[0:B]
    cell_ref[0] = res[B:2 * B]


# ----------------------------------------------------------------------------
# Wrapper: embedding gather, batch padding/blocking, weight fusion, pallas_call.
# ----------------------------------------------------------------------------
@jax.jit
def encoder_forward(src, emb_table,
                    wih_f, whh_f, b_f,
                    wih_b, whh_b, b_b,
                    fc_w, fc_b):
    S, B = src.shape
    E = emb_table.shape[1]
    H = whh_f.shape[0]
    D = fc_w.shape[1]
    mm_dtype = jnp.bfloat16   # operands of the two throughput matmuls; f32 accumulation

    # (R4) pad batch to a multiple of 8 (full sublane tiles); pads ride along for free
    # on the latency-bound recurrence and are sliced off afterwards.
    B_BLK = 8
    B_pad = ((B + B_BLK - 1) // B_BLK) * B_BLK
    nblk = B_pad // B_BLK
    src_p = jnp.pad(src, ((0, 0), (0, B_pad - B)))            # pad token index 0

    # Embedding gather (+ eval-mode dropout == identity).
    embedded = jnp.take(emb_table, src_p, axis=0).astype(jnp.float32)   # (S, B_pad, E)
    # Group batch into blocks of B_BLK with time-major rows inside each block so the
    # kernel does ONE (S*B_BLK, E) @ (E, 8H) matmul per block without any in-kernel
    # reshape of the bf16 input.
    x_grouped = (embedded.astype(mm_dtype)
                 .reshape(S, nblk, B_BLK, E)
                 .transpose(1, 0, 2, 3)
                 .reshape(nblk, S * B_BLK, E))

    # Fused weights (PyTorch gate order [i, f, g, o] preserved).
    wih_fused = jnp.concatenate([wih_f, wih_b], axis=1).astype(mm_dtype)      # (E, 8H)
    whh_fused = jnp.concatenate([whh_f, whh_b], axis=1).astype(jnp.float32)   # (H, 8H)
    b_fused = jnp.concatenate([b_f, b_b], axis=1).astype(jnp.float32)         # (1, 8H)
    fcw = fc_w.astype(mm_dtype)
    fcb = fc_b.astype(jnp.float32)

    out_f, out_b, hidden, cell = pl.pallas_call(
        _encoder_kernel,
        grid=(nblk,),     # (R4)/v7x: batch-block axis; "parallel" -> 2-TC shardable
        out_shape=(
            jax.ShapeDtypeStruct((S, B_pad, H), jnp.float32),
            jax.ShapeDtypeStruct((S, B_pad, H), jnp.float32),
            jax.ShapeDtypeStruct((1, B_pad, D), jnp.float32),
            jax.ShapeDtypeStruct((1, B_pad, D), jnp.float32),
        ),
        in_specs=[
            pl.BlockSpec((1, S * B_BLK, E), lambda j: (j, 0, 0)),
            pl.BlockSpec((E, 8 * H), lambda j: (0, 0)),
            pl.BlockSpec((H, 8 * H), lambda j: (0, 0)),
            pl.BlockSpec((1, 8 * H), lambda j: (0, 0)),
            pl.BlockSpec((2 * H, D), lambda j: (0, 0)),
            pl.BlockSpec((1, D), lambda j: (0, 0)),
        ],
        out_specs=(
            pl.BlockSpec((S, B_BLK, H), lambda j: (0, j, 0)),
            pl.BlockSpec((S, B_BLK, H), lambda j: (0, j, 0)),
            pl.BlockSpec((1, B_BLK, D), lambda j: (0, j, 0)),
            pl.BlockSpec((1, B_BLK, D), lambda j: (0, j, 0)),
        ),
        scratch_shapes=[pltpu.VMEM((S, B_BLK, 8 * H), jnp.float32)],
        compiler_params=pltpu.CompilerParams(
            dimension_semantics=("parallel",),
            vmem_limit_bytes=32 * 1024 * 1024),
    )(x_grouped, wih_fused, whh_fused, b_fused, fcw, fcb)

    # (R5) single XLA concat in the wrapper; drop batch padding.
    outputs = jnp.concatenate([out_f[:, :B], out_b[:, :B]], axis=-1)
    return outputs, hidden[:, :B], cell[:, :B]


# ----------------------------------------------------------------------------
# Pure-JAX reference (mirrors torch.nn.LSTM bidirectional + fc/tanh) for checking.
# Dtypes of the three matmul groups are configurable to build a matched reference.
# ----------------------------------------------------------------------------
def reference_forward(src, emb_table, wih_f, whh_f, b_f, wih_b, whh_b, b_b,
                      fc_w, fc_b, ih_dtype=jnp.float32, hh_dtype=jnp.float32,
                      fc_dtype=jnp.float32):
    embedded = jnp.take(emb_table, src, axis=0).astype(jnp.float32)
    S, B, E = embedded.shape
    H = whh_f.shape[0]

    def mm(a, w, dt):
        return jnp.dot(a.astype(dt), w.astype(dt),
                       preferred_element_type=jnp.float32,
                       precision=jax.lax.Precision.HIGHEST)

    def cell_step(wih, whh, b, carry, x_t):
        h, c = carry
        gates = mm(x_t, wih, ih_dtype) + mm(h, whh, hh_dtype) + b
        i, f, g, o = jnp.split(gates, 4, axis=1)
        i, f, g, o = jax.nn.sigmoid(i), jax.nn.sigmoid(f), jnp.tanh(g), jax.nn.sigmoid(o)
        c = f * c + i * g
        h = o * jnp.tanh(c)
        return (h, c), h

    init = (jnp.zeros((B, H), jnp.float32), jnp.zeros((B, H), jnp.float32))
    (h_f, c_f), out_f = lax.scan(functools.partial(cell_step, wih_f, whh_f, b_f),
                                 init, embedded)
    (h_b, c_b), out_b_rev = lax.scan(functools.partial(cell_step, wih_b, whh_b, b_b),
                                     init, embedded[::-1])
    out_b = out_b_rev[::-1]
    outputs = jnp.concatenate([out_f, out_b], axis=-1)
    hidden = jnp.tanh(mm(jnp.concatenate([h_f, h_b], axis=1), fc_w, fc_dtype) + fc_b)
    cell = jnp.tanh(mm(jnp.concatenate([c_f, c_b], axis=1), fc_w, fc_dtype) + fc_b)
    return outputs, hidden[None], cell[None]


if __name__ == "__main__":
    # Small shapes consistent with the module.
    INPUT_DIM = 50     # vocab size
    EMB_DIM = 32
    ENC_HID = 32
    DEC_HID = 32
    SEQ_LEN = 8
    BATCH = 2

    key = jax.random.PRNGKey(0)
    keys = jax.random.split(key, 10)
    k_lstm = 1.0 / jnp.sqrt(ENC_HID)
    k_fc = 1.0 / jnp.sqrt(2 * ENC_HID)

    emb_table = jax.random.normal(keys[0], (INPUT_DIM, EMB_DIM), jnp.float32)
    # Per-direction LSTM params; biases pre-summed (b_ih + b_hh), PyTorch gate order [i,f,g,o].
    wih_f = jax.random.uniform(keys[1], (EMB_DIM, 4 * ENC_HID), jnp.float32, -k_lstm, k_lstm)
    whh_f = jax.random.uniform(keys[2], (ENC_HID, 4 * ENC_HID), jnp.float32, -k_lstm, k_lstm)
    b_f = jax.random.uniform(keys[3], (1, 4 * ENC_HID), jnp.float32, -k_lstm, k_lstm)
    wih_b = jax.random.uniform(keys[4], (EMB_DIM, 4 * ENC_HID), jnp.float32, -k_lstm, k_lstm)
    whh_b = jax.random.uniform(keys[5], (ENC_HID, 4 * ENC_HID), jnp.float32, -k_lstm, k_lstm)
    b_b = jax.random.uniform(keys[6], (1, 4 * ENC_HID), jnp.float32, -k_lstm, k_lstm)
    fc_w = jax.random.uniform(keys[7], (2 * ENC_HID, DEC_HID), jnp.float32, -k_fc, k_fc)
    fc_b = jax.random.uniform(keys[8], (1, DEC_HID), jnp.float32, -k_fc, k_fc)

    src = jax.random.randint(keys[9], (SEQ_LEN, BATCH), 0, INPUT_DIM, jnp.int32)

    params = (emb_table, wih_f, whh_f, b_f, wih_b, whh_b, b_b, fc_w, fc_b)

    outputs, hidden, cell = encoder_forward(src, *params)
    jax.block_until_ready((outputs, hidden, cell))

    assert outputs.shape == (SEQ_LEN, BATCH, 2 * ENC_HID)
    assert hidden.shape == (1, BATCH, DEC_HID)
    assert cell.shape == (1, BATCH, DEC_HID)

    # Tight check vs a matched reference (bf16 input-projection/fc operands, f32 recurrence).
    ref_out_m, ref_hid_m, ref_cell_m = reference_forward(
        src, *params, ih_dtype=jnp.bfloat16, hh_dtype=jnp.float32, fc_dtype=jnp.bfloat16)
    assert jnp.allclose(outputs, ref_out_m, atol=5e-3, rtol=5e-3)
    assert jnp.allclose(hidden, ref_hid_m, atol=5e-3, rtol=5e-3)
    assert jnp.allclose(cell, ref_cell_m, atol=5e-3, rtol=5e-3)

    # Looser semantic check against the full-f32 reference.
    ref_out, ref_hid, ref_cell = reference_forward(src, *params)
    assert jnp.allclose(outputs, ref_out, atol=5e-2, rtol=5e-2)
    assert jnp.allclose(hidden, ref_hid, atol=5e-2, rtol=5e-2)
    assert jnp.allclose(cell, ref_cell, atol=5e-2, rtol=5e-2)

    print("KERNEL_OK")
</pallas_src>

<mosaic_0001>
module attributes {stable_mosaic.version = 11 : i64} {
  func.func @_encoder_kernel(%arg0: i32, %arg1: memref<1x64x32xbf16, #tpu.memory_space<vmem>>, %arg2: memref<32x256xbf16, #tpu.memory_space<vmem>>, %arg3: memref<32x256xf32, #tpu.memory_space<vmem>>, %arg4: memref<1x256xf32, #tpu.memory_space<vmem>>, %arg5: memref<64x32xbf16, #tpu.memory_space<vmem>>, %arg6: memref<1x32xf32, #tpu.memory_space<vmem>>, %arg7: memref<8x8x32xf32, #tpu.memory_space<vmem>>, %arg8: memref<8x8x32xf32, #tpu.memory_space<vmem>>, %arg9: memref<1x8x32xf32, #tpu.memory_space<vmem>>, %arg10: memref<1x8x32xf32, #tpu.memory_space<vmem>>, %arg11: memref<8x8x256xf32, #tpu.memory_space<vmem>>) attributes {dimension_semantics = [#tpu.dimension_semantics<parallel>], iteration_bounds = array<i64: 1>, scalar_prefetch = 0 : i64, scratch_operands = 1 : i64, tpu.core_type = #tpu.core_type<tc>, window_params = [{transform_indices = @transform_0, window_bounds = array<i64: 1, 64, 32>}, {pipeline_mode = #tpu.pipeline_mode<synchronous>, transform_indices = @transform_1, window_bounds = array<i64: 32, 256>}, {pipeline_mode = #tpu.pipeline_mode<synchronous>, transform_indices = @transform_2, window_bounds = array<i64: 32, 256>}, {pipeline_mode = #tpu.pipeline_mode<synchronous>, transform_indices = @transform_3, window_bounds = array<i64: 1, 256>}, {pipeline_mode = #tpu.pipeline_mode<synchronous>, transform_indices = @transform_4, window_bounds = array<i64: 64, 32>}, {pipeline_mode = #tpu.pipeline_mode<synchronous>, transform_indices = @transform_5, window_bounds = array<i64: 1, 32>}, {transform_indices = @transform_6, window_bounds = array<i64: 8, 8, 32>}, {transform_indices = @transform_7, window_bounds = array<i64: 8, 8, 32>}, {transform_indices = @transform_8, window_bounds = array<i64: 1, 8, 32>}, {transform_indices = @transform_9, window_bounds = array<i64: 1, 8, 32>}]} {
    %c0 = arith.constant 0 : index
    %c0_0 = arith.constant 0 : index
    %c0_1 = arith.constant 0 : index
    %0 = vector.load %arg1[%c0, %c0_0, %c0_1] : memref<1x64x32xbf16, #tpu.memory_space<vmem>>, vector<1x64x32xbf16>
    %1 = vector.shape_cast %0 : vector<1x64x32xbf16> to vector<64x32xbf16>
    %c0_2 = arith.constant 0 : index
    %c0_3 = arith.constant 0 : index
    %2 = vector.load %arg2[%c0_2, %c0_3] : memref<32x256xbf16, #tpu.memory_space<vmem>>, vector<32x256xbf16>
    %cst = arith.constant dense<0.000000e+00> : vector<64x256xf32>
    %3 = tpu.matmul %1, %2, %cst {dimension_numbers = #tpu.dot_dimension_numbers<[1], [0], [0], [1], [0, 0, 1, 1], [], []>} : vector<64x32xbf16>, vector<32x256xbf16>, vector<64x256xf32> -> vector<64x256xf32>
    %c0_4 = arith.constant 0 : index
    %c0_5 = arith.constant 0 : index
    %4 = vector.load %arg4[%c0_4, %c0_5] : memref<1x256xf32, #tpu.memory_space<vmem>>, vector<1x256xf32>
    %5 = vector.broadcast %4 : vector<1x256xf32> to vector<64x256xf32>
    %6 = arith.addf %3, %5 : vector<64x256xf32>
    %7 = vector.shape_cast %6 : vector<64x256xf32> to vector<8x8x256xf32>
    %c0_6 = arith.constant 0 : index
    %c0_7 = arith.constant 0 : index
    %c0_8 = arith.constant 0 : index
    %8 = vector.load %arg11[%c0_6, %c0_7, %c0_8] : memref<8x8x256xf32, #tpu.memory_space<vmem>>, vector<8x8x256xf32>
    tpu.vector_store %arg11[%c0_6, %c0_7, %c0_8], %7 {strides = array<i32>} : memref<8x8x256xf32, #tpu.memory_space<vmem>>, vector<8x8x256xf32>,
    %c0_9 = arith.constant 0 : index
    %c0_10 = arith.constant 0 : index
    %9 = vector.load %arg3[%c0_9, %c0_10] : memref<32x256xf32, #tpu.memory_space<vmem>>, vector<32x256xf32>
    %cst_11 = arith.constant 0.000000e+00 : f32
    %10 = vector.broadcast %cst_11 : f32 to vector<16x32xf32>
    %c0_i32 = arith.constant 0 : i32
    %c7_i32 = arith.constant 7 : i32
    %11 = arith.subi %c7_i32, %c0_i32 : i32
    %cst_12 = arith.constant dense<0.000000e+00> : vector<16x256xf32>
    %12 = tpu.matmul %10, %9, %cst_12 {dimension_numbers = #tpu.dot_dimension_numbers<[1], [0], [0], [1], [0, 0, 1, 1], [], []>} : vector<16x32xf32>, vector<32x256xf32>, vector<16x256xf32> -> vector<16x256xf32>
    %13 = arith.index_cast %c0_i32 : i32 to index
    %c0_13 = arith.constant 0 : index
    %c0_14 = arith.constant 0 : index
    %14 = vector.load %arg11[%13, %c0_13, %c0_14] : memref<8x8x256xf32, #tpu.memory_space<vmem>>, vector<1x8x256xf32>
    %15 = vector.shape_cast %14 : vector<1x8x256xf32> to vector<8x256xf32>
    %16 = vector.extract_strided_slice %15 {offsets = [0, 0], sizes = [8, 128], strides = [1, 1]} : vector<8x256xf32> to vector<8x128xf32>
    %17 = vector.extract_strided_slice %12 {offsets = [0, 0], sizes = [8, 128], strides = [1, 1]} : vector<16x256xf32> to vector<8x128xf32>
    %18 = arith.addf %16, %17 : vector<8x128xf32>
    %19 = arith.index_cast %11 : i32 to index
    %c0_15 = arith.constant 0 : index
    %c0_16 = arith.constant 0 : index
    %20 = vector.load %arg11[%19, %c0_15, %c0_16] : memref<8x8x256xf32, #tpu.memory_space<vmem>>, vector<1x8x256xf32>
    %21 = vector.shape_cast %20 : vector<1x8x256xf32> to vector<8x256xf32>
    %22 = vector.extract_strided_slice %21 {offsets = [0, 128], sizes = [8, 128], strides = [1, 1]} : vector<8x256xf32> to vector<8x128xf32>
    %23 = vector.extract_strided_slice %12 {offsets = [8, 128], sizes = [8, 128], strides = [1, 1]} : vector<16x256xf32> to vector<8x128xf32>
    %24 = arith.addf %22, %23 : vector<8x128xf32>
    %25 = tpu.concatenate %18, %24 in 0 : vector<8x128xf32>, vector<8x128xf32> -> vector<16x128xf32>
    %26 = arith.negf %25 : vector<16x128xf32>
    %27 = math.exp %26 : vector<16x128xf32>
    %cst_17 = arith.constant 1.000000e+00 : f32
    %28 = vector.broadcast %cst_17 : f32 to vector<16x128xf32>
    %29 = arith.addf %28, %27 : vector<16x128xf32>
    %30 = arith.divf %28, %29 : vector<16x128xf32>
    %31 = math.tanh %25 : vector<16x128xf32>
    %32 = vector.extract_strided_slice %30 {offsets = [0, 32], sizes = [16, 32], strides = [1, 1]} : vector<16x128xf32> to vector<16x32xf32>
    %33 = arith.mulf %32, %10 : vector<16x32xf32>
    %34 = vector.extract_strided_slice %30 {offsets = [0, 0], sizes = [16, 32], strides = [1, 1]} : vector<16x128xf32> to vector<16x32xf32>
    %35 = vector.extract_strided_slice %31 {offsets = [0, 64], sizes = [16, 32], strides = [1, 1]} : vector<16x128xf32> to vector<16x32xf32>
    %36 = arith.mulf %34, %35 : vector<16x32xf32>
    %37 = arith.addf %33, %36 : vector<16x32xf32>
    %38 = vector.extract_strided_slice %30 {offsets = [0, 96], sizes = [16, 32], strides = [1, 1]} : vector<16x128xf32> to vector<16x32xf32>
    %39 = math.tanh %37 : vector<16x32xf32>
    %40 = arith.mulf %38, %39 : vector<16x32xf32>
    %41 = vector.extract_strided_slice %40 {offsets = [0, 0], sizes = [8, 32], strides = [1, 1]} : vector<16x32xf32> to vector<8x32xf32>
    %42 = arith.index_cast %c0_i32 : i32 to index
    %c0_18 = arith.constant 0 : index
    %c0_19 = arith.constant 0 : index
    %43 = vector.load %arg7[%42, %c0_18, %c0_19] : memref<8x8x32xf32, #tpu.memory_space<vmem>>, vector<1x8x32xf32>
    %44 = vector.shape_cast %43 : vector<1x8x32xf32> to vector<8x32xf32>
    %45 = vector.shape_cast %41 : vector<8x32xf32> to vector<1x8x32xf32>
    tpu.vector_store %arg7[%42, %c0_18, %c0_19], %45 {strides = array<i32>} : memref<8x8x32xf32, #tpu.memory_space<vmem>>, vector<1x8x32xf32>,
    %46 = vector.extract_strided_slice %40 {offsets = [8, 0], sizes = [8, 32], strides = [1, 1]} : vector<16x32xf32> to vector<8x32xf32>
    %47 = arith.index_cast %11 : i32 to index
    %c0_20 = arith.constant 0 : index
    %c0_21 = arith.constant 0 : index
    %48 = vector.load %arg8[%47, %c0_20, %c0_21] : memref<8x8x32xf32, #tpu.memory_space<vmem>>, vector<1x8x32xf32>
    %49 = vector.shape_cast %48 : vector<1x8x32xf32> to vector<8x32xf32>
    %50 = vector.shape_cast %46 : vector<8x32xf32> to vector<1x8x32xf32>
    tpu.vector_store %arg8[%47, %c0_20, %c0_21], %50 {strides = array<i32>} : memref<8x8x32xf32, #tpu.memory_space<vmem>>, vector<1x8x32xf32>,
    %c1_i32 = arith.constant 1 : i32
    %c7_i32_22 = arith.constant 7 : i32
    %51 = arith.subi %c7_i32_22, %c1_i32 : i32
    %cst_23 = arith.constant dense<0.000000e+00> : vector<16x256xf32>
    %52 = tpu.matmul %40, %9, %cst_23 {dimension_numbers = #tpu.dot_dimension_numbers<[1], [0], [0], [1], [0, 0, 1, 1], [], []>} : vector<16x32xf32>, vector<32x256xf32>, vector<16x256xf32> -> vector<16x256xf32>
    %53 = arith.index_cast %c1_i32 : i32 to index
    %c0_24 = arith.constant 0 : index
    %c0_25 = arith.constant 0 : index
    %54 = vector.load %arg11[%53, %c0_24, %c0_25] : memref<8x8x256xf32, #tpu.memory_space<vmem>>, vector<1x8x256xf32>
    %55 = vector.shape_cast %54 : vector<1x8x256xf32> to vector<8x256xf32>
    %56 = vector.extract_strided_slice %55 {offsets = [0, 0], sizes = [8, 128], strides = [1, 1]} : vector<8x256xf32> to vector<8x128xf32>
    %57 = vector.extract_strided_slice %52 {offsets = [0, 0], sizes = [8, 128], strides = [1, 1]} : vector<16x256xf32> to vector<8x128xf32>
    %58 = arith.addf %56, %57 : vector<8x128xf32>
    %59 = arith.index_cast %51 : i32 to index
    %c0_26 = arith.constant 0 : index
    %c0_27 = arith.constant 0 : index
    %60 = vector.load %arg11[%59, %c0_26, %c0_27] : memref<8x8x256xf32, #tpu.memory_space<vmem>>, vector<1x8x256xf32>
    %61 = vector.shape_cast %60 : vector<1x8x256xf32> to vector<8x256xf32>
    %62 = vector.extract_strided_slice %61 {offsets = [0, 128], sizes = [8, 128], strides = [1, 1]} : vector<8x256xf32> to vector<8x128xf32>
    %63 = vector.extract_strided_slice %52 {offsets = [8, 128], sizes = [8, 128], strides = [1, 1]} : vector<16x256xf32> to vector<8x128xf32>
    %64 = arith.addf %62, %63 : vector<8x128xf32>
    %65 = tpu.concatenate %58, %64 in 0 : vector<8x128xf32>, vector<8x128xf32> -> vector<16x128xf32>
    %66 = arith.negf %65 : vector<16x128xf32>
    %67 = math.exp %66 : vector<16x128xf32>
    %cst_28 = arith.constant 1.000000e+00 : f32
    %68 = vector.broadcast %cst_28 : f32 to vector<16x128xf32>
    %69 = arith.addf %68, %67 : vector<16x128xf32>
    %70 = arith.divf %68, %69 : vector<16x128xf32>
    %71 = math.tanh %65 : vector<16x128xf32>
    %72 = vector.extract_strided_slice %70 {offsets = [0, 32], sizes = [16, 32], strides = [1, 1]} : vector<16x128xf32> to vector<16x32xf32>
    %73 = arith.mulf %72, %37 : vector<16x32xf32>
    %74 = vector.extract_strided_slice %70 {offsets = [0, 0], sizes = [16, 32], strides = [1, 1]} : vector<16x128xf32> to vector<16x32xf32>
    %75 = vector.extract_strided_slice %71 {offsets = [0, 64], sizes = [16, 32], strides = [1, 1]} : vector<16x128xf32> to vector<16x32xf32>
    %76 = arith.mulf %74, %75 : vector<16x32xf32>
    %77 = arith.addf %73, %76 : vector<16x32xf32>
    %78 = vector.extract_strided_slice %70 {offsets = [0, 96], sizes = [16, 32], strides = [1, 1]} : vector<16x128xf32> to vector<16x32xf32>
    %79 = math.tanh %77 : vector<16x32xf32>
    %80 = arith.mulf %78, %79 : vector<16x32xf32>
    %81 = vector.extract_strided_slice %80 {offsets = [0, 0], sizes = [8, 32], strides = [1, 1]} : vector<16x32xf32> to vector<8x32xf32>
    %82 = arith.index_cast %c1_i32 : i32 to index
    %c0_29 = arith.constant 0 : index
    %c0_30 = arith.constant 0 : index
    %83 = vector.load %arg7[%82, %c0_29, %c0_30] : memref<8x8x32xf32, #tpu.memory_space<vmem>>, vector<1x8x32xf32>
    %84 = vector.shape_cast %83 : vector<1x8x32xf32> to vector<8x32xf32>
    %85 = vector.shape_cast %81 : vector<8x32xf32> to vector<1x8x32xf32>
    tpu.vector_store %arg7[%82, %c0_29, %c0_30], %85 {strides = array<i32>} : memref<8x8x32xf32, #tpu.memory_space<vmem>>, vector<1x8x32xf32>,
    %86 = vector.extract_strided_slice %80 {offsets = [8, 0], sizes = [8, 32], strides = [1, 1]} : vector<16x32xf32> to vector<8x32xf32>
    %87 = arith.index_cast %51 : i32 to index
    %c0_31 = arith.constant 0 : index
    %c0_32 = arith.constant 0 : index
    %88 = vector.load %arg8[%87, %c0_31, %c0_32] : memref<8x8x32xf32, #tpu.memory_space<vmem>>, vector<1x8x32xf32>
    %89 = vector.shape_cast %88 : vector<1x8x32xf32> to vector<8x32xf32>
    %90 = vector.shape_cast %86 : vector<8x32xf32> to vector<1x8x32xf32>
    tpu.vector_store %arg8[%87, %c0_31, %c0_32], %90 {strides = array<i32>} : memref<8x8x32xf32, #tpu.memory_space<vmem>>, vector<1x8x32xf32>,
    %c2_i32 = arith.constant 2 : i32
    %c7_i32_33 = arith.constant 7 : i32
    %91 = arith.subi %c7_i32_33, %c2_i32 : i32
    %cst_34 = arith.constant dense<0.000000e+00> : vector<16x256xf32>
    %92 = tpu.matmul %80, %9, %cst_34 {dimension_numbers = #tpu.dot_dimension_numbers<[1], [0], [0], [1], [0, 0, 1, 1], [], []>} : vector<16x32xf32>, vector<32x256xf32>, vector<16x256xf32> -> vector<16x256xf32>
    %93 = arith.index_cast %c2_i32 : i32 to index
    %c0_35 = arith.constant 0 : index
    %c0_36 = arith.constant 0 : index
    %94 = vector.load %arg11[%93, %c0_35, %c0_36] : memref<8x8x256xf32, #tpu.memory_space<vmem>>, vector<1x8x256xf32>
    %95 = vector.shape_cast %94 : vector<1x8x256xf32> to vector<8x256xf32>
    %96 = vector.extract_strided_slice %95 {offsets = [0, 0], sizes = [8, 128], strides = [1, 1]} : vector<8x256xf32> to vector<8x128xf32>
    %97 = vector.extract_strided_slice %92 {offsets = [0, 0], sizes = [8, 128], strides = [1, 1]} : vector<16x256xf32> to vector<8x128xf32>
    %98 = arith.addf %96, %97 : vector<8x128xf32>
    %99 = arith.index_cast %91 : i32 to index
    %c0_37 = arith.constant 0 : index
    %c0_38 = arith.constant 0 : index
    %100 = vector.load %arg11[%99, %c0_37, %c0_38] : memref<8x8x256xf32, #tpu.memory_space<vmem>>, vector<1x8x256xf32>
    %101 = vector.shape_cast %100 : vector<1x8x256xf32> to vector<8x256xf32>
    %102 = vector.extract_strided_slice %101 {offsets = [0, 128], sizes = [8, 128], strides = [1, 1]} : vector<8x256xf32> to vector<8x128xf32>
    %103 = vector.extract_strided_slice %92 {offsets = [8, 128], sizes = [8, 128], strides = [1, 1]} : vector<16x256xf32> to vector<8x128xf32>
    %104 = arith.addf %102, %103 : vector<8x128xf32>
    %105 = tpu.concatenate %98, %104 in 0 : vector<8x128xf32>, vector<8x128xf32> -> vector<16x128xf32>
    %106 = arith.negf %105 : vector<16x128xf32>
    %107 = math.exp %106 : vector<16x128xf32>
    %cst_39 = arith.constant 1.000000e+00 : f32
    %108 = vector.broadcast %cst_39 : f32 to vector<16x128xf32>
    %109 = arith.addf %108, %107 : vector<16x128xf32>
    %110 = arith.divf %108, %109 : vector<16x128xf32>
    %111 = math.tanh %105 : vector<16x128xf32>
    %112 = vector.extract_strided_slice %110 {offsets = [0, 32], sizes = [16, 32], strides = [1, 1]} : vector<16x128xf32> to vector<16x32xf32>
    %113 = arith.mulf %112, %77 : vector<16x32xf32>
    %114 = vector.extract_strided_slice %110 {offsets = [0, 0], sizes = [16, 32], strides = [1, 1]} : vector<16x128xf32> to vector<16x32xf32>
    %115 = vector.extract_strided_slice %111 {offsets = [0, 64], sizes = [16, 32], strides = [1, 1]} : vector<16x128xf32> to vector<16x32xf32>
    %116 = arith.mulf %114, %115 : vector<16x32xf32>
    %117 = arith.addf %113, %116 : vector<16x32xf32>
    %118 = vector.extract_strided_slice %110 {offsets = [0, 96], sizes = [16, 32], strides = [1, 1]} : vector<16x128xf32> to vector<16x32xf32>
    %119 = math.tanh %117 : vector<16x32xf32>
    %120 = arith.mulf %118, %119 : vector<16x32xf32>
    %121 = vector.extract_strided_slice %120 {offsets = [0, 0], sizes = [8, 32], strides = [1, 1]} : vector<16x32xf32> to vector<8x32xf32>
    %122 = arith.index_cast %c2_i32 : i32 to index
    %c0_40 = arith.constant 0 : index
    %c0_41 = arith.constant 0 : index
    %123 = vector.load %arg7[%122, %c0_40, %c0_41] : memref<8x8x32xf32, #tpu.memory_space<vmem>>, vector<1x8x32xf32>
    %124 = vector.shape_cast %123 : vector<1x8x32xf32> to vector<8x32xf32>
    %125 = vector.shape_cast %121 : vector<8x32xf32> to vector<1x8x32xf32>
    tpu.vector_store %arg7[%122, %c0_40, %c0_41], %125 {strides = array<i32>} : memref<8x8x32xf32, #tpu.memory_space<vmem>>, vector<1x8x32xf32>,
    %126 = vector.extract_strided_slice %120 {offsets = [8, 0], sizes = [8, 32], strides = [1, 1]} : vector<16x32xf32> to vector<8x32xf32>
    %127 = arith.index_cast %91 : i32 to index
    %c0_42 = arith.constant 0 : index
    %c0_43 = arith.constant 0 : index
    %128 = vector.load %arg8[%127, %c0_42, %c0_43] : memref<8x8x32xf32, #tpu.memory_space<vmem>>, vector<1x8x32xf32>
    %129 = vector.shape_cast %128 : vector<1x8x32xf32> to vector<8x32xf32>
    %130 = vector.shape_cast %126 : vector<8x32xf32> to vector<1x8x32xf32>
    tpu.vector_store %arg8[%127, %c0_42, %c0_43], %130 {strides = array<i32>} : memref<8x8x32xf32, #tpu.memory_space<vmem>>, vector<1x8x32xf32>,
    %c3_i32 = arith.constant 3 : i32
    %c7_i32_44 = arith.constant 7 : i32
    %131 = arith.subi %c7_i32_44, %c3_i32 : i32
    %cst_45 = arith.constant dense<0.000000e+00> : vector<16x256xf32>
    %132 = tpu.matmul %120, %9, %cst_45 {dimension_numbers = #tpu.dot_dimension_numbers<[1], [0], [0], [1], [0, 0, 1, 1], [], []>} : vector<16x32xf32>, vector<32x256xf32>, vector<16x256xf32> -> vector<16x256xf32>
    %133 = arith.index_cast %c3_i32 : i32 to index
    %c0_46 = arith.constant 0 : index
    %c0_47 = arith.constant 0 : index
    %134 = vector.load %arg11[%133, %c0_46, %c0_47] : memref<8x8x256xf32, #tpu.memory_space<vmem>>, vector<1x8x256xf32>
    %135 = vector.shape_cast %134 : vector<1x8x256xf32> to vector<8x256xf32>
    %136 = vector.extract_strided_slice %135 {offsets = [0, 0], sizes = [8, 128], strides = [1, 1]} : vector<8x256xf32> to vector<8x128xf32>
    %137 = vector.extract_strided_slice %132 {offsets = [0, 0], sizes = [8, 128], strides = [1, 1]} : vector<16x256xf32> to vector<8x128xf32>
    %138 = arith.addf %136, %137 : vector<8x128xf32>
    %139 = arith.index_cast %131 : i32 to index
    %c0_48 = arith.constant 0 : index
    %c0_49 = arith.constant 0 : index
    %140 = vector.load %arg11[%139, %c0_48, %c0_49] : memref<8x8x256xf32, #tpu.memory_space<vmem>>, vector<1x8x256xf32>
    %141 = vector.shape_cast %140 : vector<1x8x256xf32> to vector<8x256xf32>
    %142 = vector.extract_strided_slice %141 {offsets = [0, 128], sizes = [8, 128], strides = [1, 1]} : vector<8x256xf32> to vector<8x128xf32>
    %143 = vector.extract_strided_slice %132 {offsets = [8, 128], sizes = [8, 128], strides = [1, 1]} : vector<16x256xf32> to vector<8x128xf32>
    %144 = arith.addf %142, %143 : vector<8x128xf32>
    %145 = tpu.concatenate %138, %144 in 0 : vector<8x128xf32>, vector<8x128xf32> -> vector<16x128xf32>
    %146 = arith.negf %145 : vector<16x128xf32>
    %147 = math.exp %146 : vector<16x128xf32>
    %cst_50 = arith.constant 1.000000e+00 : f32
    %148 = vector.broadcast %cst_50 : f32 to vector<16x128xf32>
    %149 = arith.addf %148, %147 : vector<16x128xf32>
    %150 = arith.divf %148, %149 : vector<16x128xf32>
    %151 = math.tanh %145 : vector<16x128xf32>
    %152 = vector.extract_strided_slice %150 {offsets = [0, 32], sizes = [16, 32], strides = [1, 1]} : vector<16x128xf32> to vector<16x32xf32>
    %153 = arith.mulf %152, %117 : vector<16x32xf32>
    %154 = vector.extract_strided_slice %150 {offsets = [0, 0], sizes = [16, 32], strides = [1, 1]} : vector<16x128xf32> to vector<16x32xf32>
    %155 = vector.extract_strided_slice %151 {offsets = [0, 64], sizes = [16, 32], strides = [1, 1]} : vector<16x128xf32> to vector<16x32xf32>
    %156 = arith.mulf %154, %155 : vector<16x32xf32>
    %157 = arith.addf %153, %156 : vector<16x32xf32>
    %158 = vector.extract_strided_slice %150 {offsets = [0, 96], sizes = [16, 32], strides = [1, 1]} : vector<16x128xf32> to vector<16x32xf32>
    %159 = math.tanh %157 : vector<16x32xf32>
    %160 = arith.mulf %158, %159 : vector<16x32xf32>
    %161 = vector.extract_strided_slice %160 {offsets = [0, 0], sizes = [8, 32], strides = [1, 1]} : vector<16x32xf32> to vector<8x32xf32>
    %162 = arith.index_cast %c3_i32 : i32 to index
    %c0_51 = arith.constant 0 : index
    %c0_52 = arith.constant 0 : index
    %163 = vector.load %arg7[%162, %c0_51, %c0_52] : memref<8x8x32xf32, #tpu.memory_space<vmem>>, vector<1x8x32xf32>
    %164 = vector.shape_cast %163 : vector<1x8x32xf32> to vector<8x32xf32>
    %165 = vector.shape_cast %161 : vector<8x32xf32> to vector<1x8x32xf32>
    tpu.vector_store %arg7[%162, %c0_51, %c0_52], %165 {strides = array<i32>} : memref<8x8x32xf32, #tpu.memory_space<vmem>>, vector<1x8x32xf32>,
    %166 = vector.extract_strided_slice %160 {offsets = [8, 0], sizes = [8, 32], strides = [1, 1]} : vector<16x32xf32> to vector<8x32xf32>
    %167 = arith.index_cast %131 : i32 to index
    %c0_53 = arith.constant 0 : index
    %c0_54 = arith.constant 0 : index
    %168 = vector.load %arg8[%167, %c0_53, %c0_54] : memref<8x8x32xf32, #tpu.memory_space<vmem>>, vector<1x8x32xf32>
    %169 = vector.shape_cast %168 : vector<1x8x32xf32> to vector<8x32xf32>
    %170 = vector.shape_cast %166 : vector<8x32xf32> to vector<1x8x32xf32>
    tpu.vector_store %arg8[%167, %c0_53, %c0_54], %170 {strides = array<i32>} : memref<8x8x32xf32, #tpu.memory_space<vmem>>, vector<1x8x32xf32>,
    %c4_i32 = arith.constant 4 : i32
    %c7_i32_55 = arith.constant 7 : i32
    %171 = arith.subi %c7_i32_55, %c4_i32 : i32
    %cst_56 = arith.constant dense<0.000000e+00> : vector<16x256xf32>
    %172 = tpu.matmul %160, %9, %cst_56 {dimension_numbers = #tpu.dot_dimension_numbers<[1], [0], [0], [1], [0, 0, 1, 1], [], []>} : vector<16x32xf32>, vector<32x256xf32>, vector<16x256xf32> -> vector<16x256xf32>
    %173 = arith.index_cast %c4_i32 : i32 to index
    %c0_57 = arith.constant 0 : index
    %c0_58 = arith.constant 0 : index
    %174 = vector.load %arg11[%173, %c0_57, %c0_58] : memref<8x8x256xf32, #tpu.memory_space<vmem>>, vector<1x8x256xf32>
    %175 = vector.shape_cast %174 : vector<1x8x256xf32> to vector<8x256xf32>
    %176 = vector.extract_strided_slice %175 {offsets = [0, 0], sizes = [8, 128], strides = [1, 1]} : vector<8x256xf32> to vector<8x128xf32>
    %177 = vector.extract_strided_slice %172 {offsets = [0, 0], sizes = [8, 128], strides = [1, 1]} : vector<16x256xf32> to vector<8x128xf32>
    %178 = arith.addf %176, %177 : vector<8x128xf32>
    %179 = arith.index_cast %171 : i32 to index
    %c0_59 = arith.constant 0 : index
    %c0_60 = arith.constant 0 : index
    %180 = vector.load %arg11[%179, %c0_59, %c0_60] : memref<8x8x256xf32, #tpu.memory_space<vmem>>, vector<1x8x256xf32>
    %181 = vector.shape_cast %180 : vector<1x8x256xf32> to vector<8x256xf32>
    %182 = vector.extract_strided_slice %181 {offsets = [0, 128], sizes = [8, 128], strides = [1, 1]} : vector<8x256xf32> to vector<8x128xf32>
    %183 = vector.extract_strided_slice %172 {offsets = [8, 128], sizes = [8, 128], strides = [1, 1]} : vector<16x256xf32> to vector<8x128xf32>
    %184 = arith.addf %182, %183 : vector<8x128xf32>
    %185 = tpu.concatenate %178, %184 in 0 : vector<8x128xf32>, vector<8x128xf32> -> vector<16x128xf32>
    %186 = arith.negf %185 : vector<16x128xf32>
    %187 = math.exp %186 : vector<16x128xf32>
    %cst_61 = arith.constant 1.000000e+00 : f32
    %188 = vector.broadcast %cst_61 : f32 to vector<16x128xf32>
    %189 = arith.addf %188, %187 : vector<16x128xf32>
    %190 = arith.divf %188, %189 : vector<16x128xf32>
    %191 = math.tanh %185 : vector<16x128xf32>
    %192 = vector.extract_strided_slice %190 {offsets = [0, 32], sizes = [16, 32], strides = [1, 1]} : vector<16x128xf32> to vector<16x32xf32>
    %193 = arith.mulf %192, %157 : vector<16x32xf32>
    %194 = vector.extract_strided_slice %190 {offsets = [0, 0], sizes = [16, 32], strides = [1, 1]} : vector<16x128xf32> to vector<16x32xf32>
    %195 = vector.extract_strided_slice %191 {offsets = [0, 64], sizes = [16, 32], strides = [1, 1]} : vector<16x128xf32> to vector<16x32xf32>
    %196 = arith.mulf %194, %195 : vector<16x32xf32>
    %197 = arith.addf %193, %196 : vector<16x32xf32>
    %198 = vector.extract_strided_slice %190 {offsets = [0, 96], sizes = [16, 32], strides = [1, 1]} : vector<16x128xf32> to vector<16x32xf32>
    %199 = math.tanh %197 : vector<16x32xf32>
    %200 = arith.mulf %198, %199 : vector<16x32xf32>
    %201 = vector.extract_strided_slice %200 {offsets = [0, 0], sizes = [8, 32], strides = [1, 1]} : vector<16x32xf32> to vector<8x32xf32>
    %202 = arith.index_cast %c4_i32 : i32 to index
    %c0_62 = arith.constant 0 : index
    %c0_63 = arith.constant 0 : index
    %203 = vector.load %arg7[%202, %c0_62, %c0_63] : memref<8x8x32xf32, #tpu.memory_space<vmem>>, vector<1x8x32xf32>
    %204 = vector.shape_cast %203 : vector<1x8x32xf32> to vector<8x32xf32>
    %205 = vector.shape_cast %201 : vector<8x32xf32> to vector<1x8x32xf32>
    tpu.vector_store %arg7[%202, %c0_62, %c0_63], %205 {strides = array<i32>} : memref<8x8x32xf32, #tpu.memory_space<vmem>>, vector<1x8x32xf32>,
    %206 = vector.extract_strided_slice %200 {offsets = [8, 0], sizes = [8, 32], strides = [1, 1]} : vector<16x32xf32> to vector<8x32xf32>
    %207 = arith.index_cast %171 : i32 to index
    %c0_64 = arith.constant 0 : index
    %c0_65 = arith.constant 0 : index
    %208 = vector.load %arg8[%207, %c0_64, %c0_65] : memref<8x8x32xf32, #tpu.memory_space<vmem>>, vector<1x8x32xf32>
    %209 = vector.shape_cast %208 : vector<1x8x32xf32> to vector<8x32xf32>
    %210 = vector.shape_cast %206 : vector<8x32xf32> to vector<1x8x32xf32>
    tpu.vector_store %arg8[%207, %c0_64, %c0_65], %210 {strides = array<i32>} : memref<8x8x32xf32, #tpu.memory_space<vmem>>, vector<1x8x32xf32>,
    %c5_i32 = arith.constant 5 : i32
    %c7_i32_66 = arith.constant 7 : i32
    %211 = arith.subi %c7_i32_66, %c5_i32 : i32
    %cst_67 = arith.constant dense<0.000000e+00> : vector<16x256xf32>
    %212 = tpu.matmul %200, %9, %cst_67 {dimension_numbers = #tpu.dot_dimension_numbers<[1], [0], [0], [1], [0, 0, 1, 1], [], []>} : vector<16x32xf32>, vector<32x256xf32>, vector<16x256xf32> -> vector<16x256xf32>
    %213 = arith.index_cast %c5_i32 : i32 to index
    %c0_68 = arith.constant 0 : index
    %c0_69 = arith.constant 0 : index
    %214 = vector.load %arg11[%213, %c0_68, %c0_69] : memref<8x8x256xf32, #tpu.memory_space<vmem>>, vector<1x8x256xf32>
    %215 = vector.shape_cast %214 : vector<1x8x256xf32> to vector<8x256xf32>
    %216 = vector.extract_strided_slice %215 {offsets = [0, 0], sizes = [8, 128], strides = [1, 1]} : vector<8x256xf32> to vector<8x128xf32>
    %217 = vector.extract_strided_slice %212 {offsets = [0, 0], sizes = [8, 128], strides = [1, 1]} : vector<16x256xf32> to vector<8x128xf32>
    %218 = arith.addf %216, %217 : vector<8x128xf32>
    %219 = arith.index_cast %211 : i32 to index
    %c0_70 = arith.constant 0 : index
    %c0_71 = arith.constant 0 : index
    %220 = vector.load %arg11[%219, %c0_70, %c0_71] : memref<8x8x256xf32, #tpu.memory_space<vmem>>, vector<1x8x256xf32>
    %221 = vector.shape_cast %220 : vector<1x8x256xf32> to vector<8x256xf32>
    %222 = vector.extract_strided_slice %221 {offsets = [0, 128], sizes = [8, 128], strides = [1, 1]} : vector<8x256xf32> to vector<8x128xf32>
    %223 = vector.extract_strided_slice %212 {offsets = [8, 128], sizes = [8, 128], strides = [1, 1]} : vector<16x256xf32> to vector<8x128xf32>
    %224 = arith.addf %222, %223 : vector<8x128xf32>
    %225 = tpu.concatenate %218, %224 in 0 : vector<8x128xf32>, vector<8x128xf32> -> vector<16x128xf32>
    %226 = arith.negf %225 : vector<16x128xf32>
    %227 = math.exp %226 : vector<16x128xf32>
    %cst_72 = arith.constant 1.000000e+00 : f32
    %228 = vector.broadcast %cst_72 : f32 to vector<16x128xf32>
    %229 = arith.addf %228, %227 : vector<16x128xf32>
    %230 = arith.divf %228, %229 : vector<16x128xf32>
    %231 = math.tanh %225 : vector<16x128xf32>
    %232 = vector.extract_strided_slice %230 {offsets = [0, 32], sizes = [16, 32], strides = [1, 1]} : vector<16x128xf32> to vector<16x32xf32>
    %233 = arith.mulf %232, %197 : vector<16x32xf32>
    %234 = vector.extract_strided_slice %230 {offsets = [0, 0], sizes = [16, 32], strides = [1, 1]} : vector<16x128xf32> to vector<16x32xf32>
    %235 = vector.extract_strided_slice %231 {offsets = [0, 64], sizes = [16, 32], strides = [1, 1]} : vector<16x128xf32> to vector<16x32xf32>
    %236 = arith.mulf %234, %235 : vector<16x32xf32>
    %237 = arith.addf %233, %236 : vector<16x32xf32>
    %238 = vector.extract_strided_slice %230 {offsets = [0, 96], sizes = [16, 32], strides = [1, 1]} : vector<16x128xf32> to vector<16x32xf32>
    %239 = math.tanh %237 : vector<16x32xf32>
    %240 = arith.mulf %238, %239 : vector<16x32xf32>
    %241 = vector.extract_strided_slice %240 {offsets = [0, 0], sizes = [8, 32], strides = [1, 1]} : vector<16x32xf32> to vector<8x32xf32>
    %242 = arith.index_cast %c5_i32 : i32 to index
    %c0_73 = arith.constant 0 : index
    %c0_74 = arith.constant 0 : index
    %243 = vector.load %arg7[%242, %c0_73, %c0_74] : memref<8x8x32xf32, #tpu.memory_space<vmem>>, vector<1x8x32xf32>
    %244 = vector.shape_cast %243 : vector<1x8x32xf32> to vector<8x32xf32>
    %245 = vector.shape_cast %241 : vector<8x32xf32> to vector<1x8x32xf32>
    tpu.vector_store %arg7[%242, %c0_73, %c0_74], %245 {strides = array<i32>} : memref<8x8x32xf32, #tpu.memory_space<vmem>>, vector<1x8x32xf32>,
    %246 = vector.extract_strided_slice %240 {offsets = [8, 0], sizes = [8, 32], strides = [1, 1]} : vector<16x32xf32> to vector<8x32xf32>
    %247 = arith.index_cast %211 : i32 to index
    %c0_75 = arith.constant 0 : index
    %c0_76 = arith.constant 0 : index
    %248 = vector.load %arg8[%247, %c0_75, %c0_76] : memref<8x8x32xf32, #tpu.memory_space<vmem>>, vector<1x8x32xf32>
    %249 = vector.shape_cast %248 : vector<1x8x32xf32> to vector<8x32xf32>
    %250 = vector.shape_cast %246 : vector<8x32xf32> to vector<1x8x32xf32>
    tpu.vector_store %arg8[%247, %c0_75, %c0_76], %250 {strides = array<i32>} : memref<8x8x32xf32, #tpu.memory_space<vmem>>, vector<1x8x32xf32>,
    %c6_i32 = arith.constant 6 : i32
    %c7_i32_77 = arith.constant 7 : i32
    %251 = arith.subi %c7_i32_77, %c6_i32 : i32
    %cst_78 = arith.constant dense<0.000000e+00> : vector<16x256xf32>
    %252 = tpu.matmul %240, %9, %cst_78 {dimension_numbers = #tpu.dot_dimension_numbers<[1], [0], [0], [1], [0, 0, 1, 1], [], []>} : vector<16x32xf32>, vector<32x256xf32>, vector<16x256xf32> -> vector<16x256xf32>
    %253 = arith.index_cast %c6_i32 : i32 to index
    %c0_79 = arith.constant 0 : index
    %c0_80 = arith.constant 0 : index
    %254 = vector.load %arg11[%253, %c0_79, %c0_80] : memref<8x8x256xf32, #tpu.memory_space<vmem>>, vector<1x8x256xf32>
    %255 = vector.shape_cast %254 : vector<1x8x256xf32> to vector<8x256xf32>
    %256 = vector.extract_strided_slice %255 {offsets = [0, 0], sizes = [8, 128], strides = [1, 1]} : vector<8x256xf32> to vector<8x128xf32>
    %257 = vector.extract_strided_slice %252 {offsets = [0, 0], sizes = [8, 128], strides = [1, 1]} : vector<16x256xf32> to vector<8x128xf32>
    %258 = arith.addf %256, %257 : vector<8x128xf32>
    %259 = arith.index_cast %251 : i32 to index
    %c0_81 = arith.constant 0 : index
    %c0_82 = arith.constant 0 : index
    %260 = vector.load %arg11[%259, %c0_81, %c0_82] : memref<8x8x256xf32, #tpu.memory_space<vmem>>, vector<1x8x256xf32>
    %261 = vector.shape_cast %260 : vector<1x8x256xf32> to vector<8x256xf32>
    %262 = vector.extract_strided_slice %261 {offsets = [0, 128], sizes = [8, 128], strides = [1, 1]} : vector<8x256xf32> to vector<8x128xf32>
    %263 = vector.extract_strided_slice %252 {offsets = [8, 128], sizes = [8, 128], strides = [1, 1]} : vector<16x256xf32> to vector<8x128xf32>
    %264 = arith.addf %262, %263 : vector<8x128xf32>
    %265 = tpu.concatenate %258, %264 in 0 : vector<8x128xf32>, vector<8x128xf32> -> vector<16x128xf32>
    %266 = arith.negf %265 : vector<16x128xf32>
    %267 = math.exp %266 : vector<16x128xf32>
    %cst_83 = arith.constant 1.000000e+00 : f32
    %268 = vector.broadcast %cst_83 : f32 to vector<16x128xf32>
    %269 = arith.addf %268, %267 : vector<16x128xf32>
    %270 = arith.divf %268, %269 : vector<16x128xf32>
    %271 = math.tanh %265 : vector<16x128xf32>
    %272 = vector.extract_strided_slice %270 {offsets = [0, 32], sizes = [16, 32], strides = [1, 1]} : vector<16x128xf32> to vector<16x32xf32>
    %273 = arith.mulf %272, %237 : vector<16x32xf32>
    %274 = vector.extract_strided_slice %270 {offsets = [0, 0], sizes = [16, 32], strides = [1, 1]} : vector<16x128xf32> to vector<16x32xf32>
    %275 = vector.extract_strided_slice %271 {offsets = [0, 64], sizes = [16, 32], strides = [1, 1]} : vector<16x128xf32> to vector<16x32xf32>
    %276 = arith.mulf %274, %275 : vector<16x32xf32>
    %277 = arith.addf %273, %276 : vector<16x32xf32>
    %278 = vector.extract_strided_slice %270 {offsets = [0, 96], sizes = [16, 32], strides = [1, 1]} : vector<16x128xf32> to vector<16x32xf32>
    %279 = math.tanh %277 : vector<16x32xf32>
    %280 = arith.mulf %278, %279 : vector<16x32xf32>
    %281 = vector.extract_strided_slice %280 {offsets = [0, 0], sizes = [8, 32], strides = [1, 1]} : vector<16x32xf32> to vector<8x32xf32>
    %282 = arith.index_cast %c6_i32 : i32 to index
    %c0_84 = arith.constant 0 : index
    %c0_85 = arith.constant 0 : index
    %283 = vector.load %arg7[%282, %c0_84, %c0_85] : memref<8x8x32xf32, #tpu.memory_space<vmem>>, vector<1x8x32xf32>
    %284 = vector.shape_cast %283 : vector<1x8x32xf32> to vector<8x32xf32>
    %285 = vector.shape_cast %281 : vector<8x32xf32> to vector<1x8x32xf32>
    tpu.vector_store %arg7[%282, %c0_84, %c0_85], %285 {strides = array<i32>} : memref<8x8x32xf32, #tpu.memory_space<vmem>>, vector<1x8x32xf32>,
    %286 = vector.extract_strided_slice %280 {offsets = [8, 0], sizes = [8, 32], strides = [1, 1]} : vector<16x32xf32> to vector<8x32xf32>
    %287 = arith.index_cast %251 : i32 to index
    %c0_86 = arith.constant 0 : index
    %c0_87 = arith.constant 0 : index
    %288 = vector.load %arg8[%287, %c0_86, %c0_87] : memref<8x8x32xf32, #tpu.memory_space<vmem>>, vector<1x8x32xf32>
    %289 = vector.shape_cast %288 : vector<1x8x32xf32> to vector<8x32xf32>
    %290 = vector.shape_cast %286 : vector<8x32xf32> to vector<1x8x32xf32>
    tpu.vector_store %arg8[%287, %c0_86, %c0_87], %290 {strides = array<i32>} : memref<8x8x32xf32, #tpu.memory_space<vmem>>, vector<1x8x32xf32>,
    %c7_i32_88 = arith.constant 7 : i32
    %c7_i32_89 = arith.constant 7 : i32
    %291 = arith.subi %c7_i32_89, %c7_i32_88 : i32
    %cst_90 = arith.constant dense<0.000000e+00> : vector<16x256xf32>
    %292 = tpu.matmul %280, %9, %cst_90 {dimension_numbers = #tpu.dot_dimension_numbers<[1], [0], [0], [1], [0, 0, 1, 1], [], []>} : vector<16x32xf32>, vector<32x256xf32>, vector<16x256xf32> -> vector<16x256xf32>
    %293 = arith.index_cast %c7_i32_88 : i32 to index
    %c0_91 = arith.constant 0 : index
    %c0_92 = arith.constant 0 : index
    %294 = vector.load %arg11[%293, %c0_91, %c0_92] : memref<8x8x256xf32, #tpu.memory_space<vmem>>, vector<1x8x256xf32>
    %295 = vector.shape_cast %294 : vector<1x8x256xf32> to vector<8x256xf32>
    %296 = vector.extract_strided_slice %295 {offsets = [0, 0], sizes = [8, 128], strides = [1, 1]} : vector<8x256xf32> to vector<8x128xf32>
    %297 = vector.extract_strided_slice %292 {offsets = [0, 0], sizes = [8, 128], strides = [1, 1]} : vector<16x256xf32> to vector<8x128xf32>
    %298 = arith.addf %296, %297 : vector<8x128xf32>
    %299 = arith.index_cast %291 : i32 to index
    %c0_93 = arith.constant 0 : index
    %c0_94 = arith.constant 0 : index
    %300 = vector.load %arg11[%299, %c0_93, %c0_94] : memref<8x8x256xf32, #tpu.memory_space<vmem>>, vector<1x8x256xf32>
    %301 = vector.shape_cast %300 : vector<1x8x256xf32> to vector<8x256xf32>
    %302 = vector.extract_strided_slice %301 {offsets = [0, 128], sizes = [8, 128], strides = [1, 1]} : vector<8x256xf32> to vector<8x128xf32>
    %303 = vector.extract_strided_slice %292 {offsets = [8, 128], sizes = [8, 128], strides = [1, 1]} : vector<16x256xf32> to vector<8x128xf32>
    %304 = arith.addf %302, %303 : vector<8x128xf32>
    %305 = tpu.concatenate %298, %304 in 0 : vector<8x128xf32>, vector<8x128xf32> -> vector<16x128xf32>
    %306 = arith.negf %305 : vector<16x128xf32>
    %307 = math.exp %306 : vector<16x128xf32>
    %cst_95 = arith.constant 1.000000e+00 : f32
    %308 = vector.broadcast %cst_95 : f32 to vector<16x128xf32>
    %309 = arith.addf %308, %307 : vector<16x128xf32>
    %310 = arith.divf %308, %309 : vector<16x128xf32>
    %311 = math.tanh %305 : vector<16x128xf32>
    %312 = vector.extract_strided_slice %310 {offsets = [0, 32], sizes = [16, 32], strides = [1, 1]} : vector<16x128xf32> to vector<16x32xf32>
    %313 = arith.mulf %312, %277 : vector<16x32xf32>
    %314 = vector.extract_strided_slice %310 {offsets = [0, 0], sizes = [16, 32], strides = [1, 1]} : vector<16x128xf32> to vector<16x32xf32>
    %315 = vector.extract_strided_slice %311 {offsets = [0, 64], sizes = [16, 32], strides = [1, 1]} : vector<16x128xf32> to vector<16x32xf32>
    %316 = arith.mulf %314, %315 : vector<16x32xf32>
    %317 = arith.addf %313, %316 : vector<16x32xf32>
    %318 = vector.extract_strided_slice %310 {offsets = [0, 96], sizes = [16, 32], strides = [1, 1]} : vector<16x128xf32> to vector<16x32xf32>
    %319 = math.tanh %317 : vector<16x32xf32>
    %320 = arith.mulf %318, %319 : vector<16x32xf32>
    %321 = vector.extract_strided_slice %320 {offsets = [0, 0], sizes = [8, 32], strides = [1, 1]} : vector<16x32xf32> to vector<8x32xf32>
    %322 = arith.index_cast %c7_i32_88 : i32 to index
    %c0_96 = arith.constant 0 : index
    %c0_97 = arith.constant 0 : index
    %323 = vector.load %arg7[%322, %c0_96, %c0_97] : memref<8x8x32xf32, #tpu.memory_space<vmem>>, vector<1x8x32xf32>
    %324 = vector.shape_cast %323 : vector<1x8x32xf32> to vector<8x32xf32>
    %325 = vector.shape_cast %321 : vector<8x32xf32> to vector<1x8x32xf32>
    tpu.vector_store %arg7[%322, %c0_96, %c0_97], %325 {strides = array<i32>} : memref<8x8x32xf32, #tpu.memory_space<vmem>>, vector<1x8x32xf32>,
    %326 = vector.extract_strided_slice %320 {offsets = [8, 0], sizes = [8, 32], strides = [1, 1]} : vector<16x32xf32> to vector<8x32xf32>
    %327 = arith.index_cast %291 : i32 to index
    %c0_98 = arith.constant 0 : index
    %c0_99 = arith.constant 0 : index
    %328 = vector.load %arg8[%327, %c0_98, %c0_99] : memref<8x8x32xf32, #tpu.memory_space<vmem>>, vector<1x8x32xf32>
    %329 = vector.shape_cast %328 : vector<1x8x32xf32> to vector<8x32xf32>
    %330 = vector.shape_cast %326 : vector<8x32xf32> to vector<1x8x32xf32>
    tpu.vector_store %arg8[%327, %c0_98, %c0_99], %330 {strides = array<i32>} : memref<8x8x32xf32, #tpu.memory_space<vmem>>, vector<1x8x32xf32>,
    %c8_i32 = arith.constant 8 : i32
    %331 = vector.extract_strided_slice %320 {offsets = [0, 0], sizes = [8, 32], strides = [1, 1]} : vector<16x32xf32> to vector<8x32xf32>
    %332 = vector.extract_strided_slice %320 {offsets = [8, 0], sizes = [8, 32], strides = [1, 1]} : vector<16x32xf32> to vector<8x32xf32>
    %333 = tpu.concatenate %331, %332 in 1 : vector<8x32xf32>, vector<8x32xf32> -> vector<8x64xf32>
    %334 = vector.extract_strided_slice %317 {offsets = [0, 0], sizes = [8, 32], strides = [1, 1]} : vector<16x32xf32> to vector<8x32xf32>
    %335 = vector.extract_strided_slice %317 {offsets = [8, 0], sizes = [8, 32], strides = [1, 1]} : vector<16x32xf32> to vector<8x32xf32>
    %336 = tpu.concatenate %334, %335 in 1 : vector<8x32xf32>, vector<8x32xf32> -> vector<8x64xf32>
    %337 = tpu.concatenate %333, %336 in 0 : vector<8x64xf32>, vector<8x64xf32> -> vector<16x64xf32>
    %338 = arith.truncf %337 : vector<16x64xf32> to vector<16x64xbf16>
    %c0_100 = arith.constant 0 : index
    %c0_101 = arith.constant 0 : index
    %339 = vector.load %arg5[%c0_100, %c0_101] : memref<64x32xbf16, #tpu.memory_space<vmem>>, vector<64x32xbf16>
    %cst_102 = arith.constant dense<0.000000e+00> : vector<16x32xf32>
    %340 = tpu.matmul %338, %339, %cst_102 {dimension_numbers = #tpu.dot_dimension_numbers<[1], [0], [0], [1], [0, 0, 1, 1], [], []>} : vector<16x64xbf16>, vector<64x32xbf16>, vector<16x32xf32> -> vector<16x32xf32>
    %c0_103 = arith.constant 0 : index
    %c0_104 = arith.constant 0 : index
    %341 = vector.load %arg6[%c0_103, %c0_104] : memref<1x32xf32, #tpu.memory_space<vmem>>, vector<1x32xf32>
    %342 = vector.broadcast %341 : vector<1x32xf32> to vector<16x32xf32>
    %343 = arith.addf %340, %342 : vector<16x32xf32>
    %344 = math.tanh %343 : vector<16x32xf32>
    %345 = vector.extract_strided_slice %344 {offsets = [0, 0], sizes = [8, 32], strides = [1, 1]} : vector<16x32xf32> to vector<8x32xf32>
    %c0_105 = arith.constant 0 : index
    %c0_106 = arith.constant 0 : index
    %c0_107 = arith.constant 0 : index
    %346 = vector.load %arg9[%c0_105, %c0_106, %c0_107] : memref<1x8x32xf32, #tpu.memory_space<vmem>>, vector<1x8x32xf32>
    %347 = vector.shape_cast %346 : vector<1x8x32xf32> to vector<8x32xf32>
    %348 = vector.shape_cast %345 : vector<8x32xf32> to vector<1x8x32xf32>
    tpu.vector_store %arg9[%c0_105, %c0_106, %c0_107], %348 {strides = array<i32>} : memref<1x8x32xf32, #tpu.memory_space<vmem>>, vector<1x8x32xf32>,
    %349 = vector.extract_strided_slice %344 {offsets = [8, 0], sizes = [8, 32], strides = [1, 1]} : vector<16x32xf32> to vector<8x32xf32>
    %c0_108 = arith.constant 0 : index
    %c0_109 = arith.constant 0 : index
    %c0_110 = arith.constant 0 : index
    %350 = vector.load %arg10[%c0_108, %c0_109, %c0_110] : memref<1x8x32xf32, #tpu.memory_space<vmem>>, vector<1x8x32xf32>
    %351 = vector.shape_cast %350 : vector<1x8x32xf32> to vector<8x32xf32>
    %352 = vector.shape_cast %349 : vector<8x32xf32> to vector<1x8x32xf32>
    tpu.vector_store %arg10[%c0_108, %c0_109, %c0_110], %352 {strides = array<i32>} : memref<1x8x32xf32, #tpu.memory_space<vmem>>, vector<1x8x32xf32>,
    return
  }
  func.func @transform_0(%arg0: i32) -> (i32, i32, i32) {
    %c0_i32 = arith.constant 0 : i32
    %c0_i32_0 = arith.constant 0 : i32
    %c0_i32_1 = arith.constant 0 : i32
    return %arg0, %c0_i32, %c0_i32_0 : i32, i32, i32
  }
  func.func @transform_1(%arg0: i32) -> (i32, i32) {
    %c0_i32 = arith.constant 0 : i32
    %c0_i32_0 = arith.constant 0 : i32
    %c0_i32_1 = arith.constant 0 : i32
    return %c0_i32, %c0_i32_0 : i32, i32
  }
  func.func @transform_2(%arg0: i32) -> (i32, i32) {
    %c0_i32 = arith.constant 0 : i32
    %c0_i32_0 = arith.constant 0 : i32
    %c0_i32_1 = arith.constant 0 : i32
    return %c0_i32, %c0_i32_0 : i32, i32
  }
  func.func @transform_3(%arg0: i32) -> (i32, i32) {
    %c0_i32 = arith.constant 0 : i32
    %c0_i32_0 = arith.constant 0 : i32
    %c0_i32_1 = arith.constant 0 : i32
    return %c0_i32, %c0_i32_0 : i32, i32
  }
  func.func @transform_4(%arg0: i32) -> (i32, i32) {
    %c0_i32 = arith.constant 0 : i32
    %c0_i32_0 = arith.constant 0 : i32
    %c0_i32_1 = arith.constant 0 : i32
    return %c0_i32, %c0_i32_0 : i32, i32
  }
  func.func @transform_5(%arg0: i32) -> (i32, i32) {
    %c0_i32 = arith.constant 0 : i32
    %c0_i32_0 = arith.constant 0 : i32
    %c0_i32_1 = arith.constant 0 : i32
    return %c0_i32, %c0_i32_0 : i32, i32
  }
  func.func @transform_6(%arg0: i32) -> (i32, i32, i32) {
    %c0_i32 = arith.constant 0 : i32
    %c0_i32_0 = arith.constant 0 : i32
    %c0_i32_1 = arith.constant 0 : i32
    return %c0_i32, %arg0, %c0_i32_0 : i32, i32, i32
  }
  func.func @transform_7(%arg0: i32) -> (i32, i32, i32) {
    %c0_i32 = arith.constant 0 : i32
    %c0_i32_0 = arith.constant 0 : i32
    %c0_i32_1 = arith.constant 0 : i32
    return %c0_i32, %arg0, %c0_i32_0 : i32, i32, i32
  }
  func.func @transform_8(%arg0: i32) -> (i32, i32, i32) {
    %c0_i32 = arith.constant 0 : i32
    %c0_i32_0 = arith.constant 0 : i32
    %c0_i32_1 = arith.constant 0 : i32
    return %c0_i32, %arg0, %c0_i32_0 : i32, i32, i32
  }
  func.func @transform_9(%arg0: i32) -> (i32, i32, i32) {
    %c0_i32 = arith.constant 0 : i32
    %c0_i32_0 = arith.constant 0 : i32
    %c0_i32_1 = arith.constant 0 : i32
    return %c0_i32, %arg0, %c0_i32_0 : i32, i32, i32
  }
}

</mosaic_0001>

<llo_original>
// kernel: encoder_forward.1
$region0: #{encoder_forward.1}
  #allocation0 [shape = 'u32[]', space=smem, size = 0x4, offset = 0x4, fixed_abs, tag = 'smem constant byte address 0x4 - core index']
  #allocation1 [shape = 'u32[144,128]{1,0:T(1,128)}', space=vmem, size = 0x12000, scoped, tag = 'internal scratch']
  #allocation2 [shape = 'f32[8,8,256]{2,1,0:T(8,128)}', space=vmem, size = 0x10000, scoped, tag = 'scratch operand']
  %s0 = inlined_call_operand.vmem [shape: bf16[1,64,32], index: 0, kind: input, shape index: {}]
  %s1 = inlined_call_operand.vmem [shape: bf16[32,256], index: 1, kind: input, shape index: {}]
  %s2 = inlined_call_operand.vmem [shape: f32[32,256], index: 2, kind: input, shape index: {}]
  %s3 = inlined_call_operand.vmem [shape: f32[1,256], index: 3, kind: input, shape index: {}]
  %s4 = inlined_call_operand.vmem [shape: bf16[64,32], index: 4, kind: input, shape index: {}]
  %s5 = inlined_call_operand.vmem [shape: f32[1,32], index: 5, kind: input, shape index: {}]
  %s6 = inlined_call_operand.vmem [shape: f32[8,8,32], index: 6, kind: output, shape index: {0}]
  %s7 = inlined_call_operand.vmem [shape: f32[8,8,32], index: 7, kind: output, shape index: {1}]
  %s8 = inlined_call_operand.vmem [shape: f32[1,8,32], index: 8, kind: output, shape index: {2}]
  %s9 = inlined_call_operand.vmem [shape: f32[1,8,32], index: 9, kind: output, shape index: {3}]
  %10 = xla_tuple %s6, %s7, %s8, %s9
  %s11 = sld [smem:[#allocation0]]
  $region58: #{encoder_forward.1} parent=0
    _
  %s13 = ssub.s32 1, %s11
  %s14 = scalar_select 0, %s13, %s11
  // Predicated region
  $region2: #{encoder_forward.1} parent=0 // pred_check
    _
  $region3: #{encoder_forward.1} parent=0 // pred_check_branch
    %16 = sbr.rel (0) target = $region5
  $region4: #{encoder_forward.1} parent=0 // pred_region
    _
  $region5: #{encoder_forward.1} parent=0 // pred_fallthru
    _
  // Predicated region
  $region6: #{encoder_forward.1} parent=0 // pred_check
    _
  $region7: #{encoder_forward.1} parent=0 // pred_check_branch
    %18 = sbr.rel (0) target = $region9
  $region8: #{encoder_forward.1} parent=0 // pred_region
    _
  $region9: #{encoder_forward.1} parent=0 // pred_fallthru
    _
  // Predicated region
  $region10: #{encoder_forward.1} parent=0 // pred_check
    _
  $region11: #{encoder_forward.1} parent=0 // pred_check_branch
    %20 = sbr.rel (0) target = $region13
  $region12: #{encoder_forward.1} parent=0 // pred_region
    _
  $region13: #{encoder_forward.1} parent=0 // pred_fallthru
    _
  // Predicated region
  $region14: #{encoder_forward.1} parent=0 // pred_check
    _
  $region15: #{encoder_forward.1} parent=0 // pred_check_branch
    %22 = sbr.rel (0) target = $region17
  $region16: #{encoder_forward.1} parent=0 // pred_region
    _
  $region17: #{encoder_forward.1} parent=0 // pred_fallthru
    _
  // Predicated region
  $region18: #{encoder_forward.1} parent=0 // pred_check
    _
  $region19: #{encoder_forward.1} parent=0 // pred_check_branch
    %24 = sbr.rel (0) target = $region21
  $region20: #{encoder_forward.1} parent=0 // pred_region
    _
  $region21: #{encoder_forward.1} parent=0 // pred_fallthru
    _
  // Predicated region
  $region22: #{encoder_forward.1} parent=0 // pred_check
    _
  $region23: #{encoder_forward.1} parent=0 // pred_check_branch
    %26 = sbr.rel (0) target = $region25
  $region24: #{encoder_forward.1} parent=0 // pred_region
    _
  $region25: #{encoder_forward.1} parent=0 // pred_fallthru
    _
  %v28 = vld [vmem:[%s0] sm:$0xf]
  %v29 = vld [vmem:[%s0 + $0x4] sm:$0xf]
  %v30 = vld [vmem:[%s0 + $0x8] sm:$0xf]
  %v31 = vld [vmem:[%s0 + $0xc] sm:$0xf]
  %v32 = vld [vmem:[%s0 + $0x10] sm:$0xf]
  %v33 = vld [vmem:[%s0 + $0x14] sm:$0xf]
  %v34 = vld [vmem:[%s0 + $0x18] sm:$0xf]
  %v35 = vld [vmem:[%s0 + $0x1c] sm:$0xf]
  %v36 = vld [vmem:[%s1] sm:$0xff]
  %v37 = vld [vmem:[%s1 + $0x8] sm:$0xff]
  %v38 = vld [vmem:[%s1 + $0x10] sm:$0xff]
  %v39 = vld [vmem:[%s1 + $0x18] sm:$0xff]
  %v40 = vld [vmem:[%s3] sm:$0x3]
  %v42 = vlaneseq
  %v43 = vshrl.u32 %v42, 7
  %v44 = vsub.s32 0, %v43
  %v45 = vrot.slane %v40, %v44
  %v46 = vlaneseq
  %v47 = vshrl.u32 %v46, 7
  %v48 = vsub.s32 1, %v47
  %v49 = vrot.slane %v40, %v48
  %v60 = vunpack.c.l.b16 %v28
  %v61 = vunpack.c.l.b16 %v29
  %v62 = vunpack.c.l.b16 %v30
  %v63 = vunpack.c.l.b16 %v31
  %v64 = vunpack.c.l.b16 %v32
  %v65 = vunpack.c.l.b16 %v33
  %v66 = vunpack.c.l.b16 %v34
  %v67 = vunpack.c.l.b16 %v35
  %v68 = vpack.c.b16 %v61, %v60
  %v69 = vpack.c.b16 %v63, %v62
  %v70 = vpack.c.b16 %v65, %v64
  %v71 = vpack.c.b16 %v67, %v66
  %v76 = vunpack.c.l.b16 %v36
  %v77 = vunpack.c.h.b16 %v36
  %v78 = vunpack.c.l.b16 %v37
  %v79 = vunpack.c.h.b16 %v37
  %v80 = vunpack.c.l.b16 %v38
  %v81 = vunpack.c.h.b16 %v38
  %v82 = vunpack.c.l.b16 %v39
  %v83 = vunpack.c.h.b16 %v39
  %v84 = vpack.c.b16 %v78, %v76
  %v85 = vpack.c.b16 %v79, %v77
  %v86 = vpack.c.b16 %v82, %v80
  %v87 = vpack.c.b16 %v83, %v81
  %vm92 = vcmask 261120
  %v94 = vsel %vm92, %v68, 0
  %v97 = vsel %vm92, %v69, 0
  %v100 = vsel %vm92, %v70, 0
  %v103 = vsel %vm92, %v71, 0
  %105 = vmatprep.subr.bf16.mxu0 %v85
  %106 = vmatpush1.bf16.msra.mxu0 %v84
  %107 = vmatprep.subr.bf16.mxu0 %v87
  %108 = vmatpush1.bf16.msra.mxu0 %v86
  %109 = vmatprep.subr.bf16.mxu0 0
  %110 = vmatpush1.bf16.msra.mxu0 0
  %111 = vmatprep.subr.bf16.mxu0 0
  %112 = vmatpush1.bf16.msra.mxu0 0
  %113 = vmatprep.subr.bf16.mxu0 0
  %114 = vmatpush1.bf16.msra.mxu0 0
  %115 = vmatprep.subr.bf16.mxu0 0
  %116 = vmatpush1.bf16.msra.mxu0 0
  %117 = vmatprep.subr.bf16.mxu0 0
  %118 = vmatpush1.bf16.msra.mxu0 0
  %119 = vmatprep.subr.bf16.mxu0 0
  %120 = vmatpush1.bf16.msra.mxu0 0
  %121 = vmatprep.subr.bf16.mxu0 0
  %122 = vmatpush1.bf16.msra.mxu0 0
  %123 = vmatprep.subr.bf16.mxu0 0
  %124 = vmatpush1.bf16.msra.mxu0 0
  %125 = vmatprep.subr.bf16.mxu0 0
  %126 = vmatpush1.bf16.msra.mxu0 0
  %127 = vmatprep.subr.bf16.mxu0 0
  %128 = vmatpush1.bf16.msra.mxu0 0
  %129 = vmatprep.subr.bf16.mxu0 0
  %130 = vmatpush1.bf16.msra.mxu0 0
  %131 = vmatprep.subr.bf16.mxu0 0
  %132 = vmatpush1.bf16.msra.mxu0 0
  %133 = vmatprep.subr.bf16.mxu0 0
  %134 = vmatpush1.bf16.msra.mxu0 0
  %135 = vmatprep.subr.bf16.mxu0 0
  %136 = vmatpush1.bf16.msra.mxu0 0
  %137 = vmatprep.mubr.bf16.mxu0 0
  %138 = vmatmul.mubr.bf16.gmra.mrb[0].mxu0 %v94
  %v139 = vpop.f32.mrb[0].mxu0
  %v140 = vadd.f32 %v45, %v139
  %v141 = vpop.f32.mrb[0].mxu0
  %v142 = vadd.f32 %v49, %v141
  %v143 = vpop.f32.mrb[0].mxu0
  %v144 = vadd.f32 %v45, %v143
  %v145 = vpop.f32.mrb[0].mxu0
  %v146 = vadd.f32 %v49, %v145
  %147 = vmatprep.mubr.bf16.mxu0 0
  %148 = vmatmul.mubr.bf16.gmra.mrb[0].mxu0 %v97
  %v149 = vpop.f32.mrb[0].mxu0
  %v150 = vadd.f32 %v45, %v149
  %v151 = vpop.f32.mrb[0].mxu0
  %v152 = vadd.f32 %v49, %v151
  %v153 = vpop.f32.mrb[0].mxu0
  %v154 = vadd.f32 %v45, %v153
  %v155 = vpop.f32.mrb[0].mxu0
  %v156 = vadd.f32 %v49, %v155
  %157 = vmatprep.mubr.bf16.mxu0 0
  %158 = vmatmul.mubr.bf16.gmra.mrb[0].mxu0 %v100
  %v159 = vpop.f32.mrb[0].mxu0
  %v160 = vadd.f32 %v45, %v159
  %v161 = vpop.f32.mrb[0].mxu0
  %v162 = vadd.f32 %v49, %v161
  %v163 = vpop.f32.mrb[0].mxu0
  %v164 = vadd.f32 %v45, %v163
  %v165 = vpop.f32.mrb[0].mxu0
  %v166 = vadd.f32 %v49, %v165
  %167 = vmatprep.mubr.bf16.mxu0 0
  %168 = vmatmul.mubr.bf16.gmra.mrb[0].mxu0 %v103
  %v169 = vpop.f32.mrb[0].mxu0
  %v170 = vadd.f32 %v45, %v169
  %v171 = vpop.f32.mrb[0].mxu0
  %v172 = vadd.f32 %v49, %v171
  %v173 = vpop.f32.mrb[0].mxu0
  %v174 = vadd.f32 %v45, %v173
  %v175 = vpop.f32.mrb[0].mxu0
  %v176 = vadd.f32 %v49, %v175
  %177 = vdwg.mxu0
  %178 = vst [vmem:[#allocation2] sm:$0xff] %v140
  %179 = vst [vmem:[#allocation2 + $0x8] sm:$0xff] %v142
  %180 = vst [vmem:[#allocation2 + $0x10] sm:$0xff] %v144
  %181 = vst [vmem:[#allocation2 + $0x18] sm:$0xff] %v146
  %182 = vst [vmem:[#allocation2 + $0x20] sm:$0xff] %v150
  %183 = vst [vmem:[#allocation2 + $0x28] sm:$0xff] %v152
  %184 = vst [vmem:[#allocation2 + $0x30] sm:$0xff] %v154
  %185 = vst [vmem:[#allocation2 + $0x38] sm:$0xff] %v156
  %186 = vst [vmem:[#allocation2 + $0x40] sm:$0xff] %v160
  %187 = vst [vmem:[#allocation2 + $0x48] sm:$0xff] %v162
  %188 = vst [vmem:[#allocation2 + $0x50] sm:$0xff] %v164
  %189 = vst [vmem:[#allocation2 + $0x58] sm:$0xff] %v166
  %190 = vst [vmem:[#allocation2 + $0x60] sm:$0xff] %v170
  %191 = vst [vmem:[#allocation2 + $0x68] sm:$0xff] %v172
  %192 = vst [vmem:[#allocation2 + $0x70] sm:$0xff] %v174
  %193 = vst [vmem:[#allocation2 + $0x78] sm:$0xff] %v176
  %v194 = vld [vmem:[%s2] sm:$0xff]
  %v195 = vld [vmem:[%s2 + $0x8] sm:$0xff]
  %v196 = vld [vmem:[%s2 + $0x10] sm:$0xff]
  %v197 = vld [vmem:[%s2 + $0x18] sm:$0xff]
  %v198 = vld [vmem:[%s2 + $0x20] sm:$0xff]
  %v199 = vld [vmem:[%s2 + $0x28] sm:$0xff]
  %v200 = vld [vmem:[%s2 + $0x30] sm:$0xff]
  %v201 = vld [vmem:[%s2 + $0x38] sm:$0xff]
  %v203 = vsel %vm92, 0.0, 0
  %205 = vmatprep.subr.mxu0 %v195
  %206 = vmatpush1.msra.mxu0 %v194
  %207 = vmatprep.subr.mxu0 %v197
  %208 = vmatpush1.msra.mxu0 %v196
  %209 = vmatprep.subr.mxu0 %v199
  %210 = vmatpush1.msra.mxu0 %v198
  %211 = vmatprep.subr.mxu0 %v201
  %212 = vmatpush1.msra.mxu0 %v200
  %213 = vmatprep.subr.mxu0 0.0
  %214 = vmatpush1.msra.mxu0 0.0
  %215 = vmatprep.subr.mxu0 0.0
  %216 = vmatpush1.msra.mxu0 0.0
  %217 = vmatprep.subr.mxu0 0.0
  %218 = vmatpush1.msra.mxu0 0.0
  %219 = vmatprep.subr.mxu0 0.0
  %220 = vmatpush1.msra.mxu0 0.0
  %221 = vmatprep.subr.mxu0 0.0
  %222 = vmatpush1.msra.mxu0 0.0
  %223 = vmatprep.subr.mxu0 0.0
  %224 = vmatpush1.msra.mxu0 0.0
  %225 = vmatprep.subr.mxu0 0.0
  %226 = vmatpush1.msra.mxu0 0.0
  %227 = vmatprep.subr.mxu0 0.0
  %228 = vmatpush1.msra.mxu0 0.0
  %229 = vmatprep.subr.mxu0 0.0
  %230 = vmatpush1.msra.mxu0 0.0
  %231 = vmatprep.subr.mxu0 0.0
  %232 = vmatpush1.msra.mxu0 0.0
  %233 = vmatprep.subr.mxu0 0.0
  %234 = vmatpush1.msra.mxu0 0.0
  %235 = vmatprep.subr.mxu0 0.0
  %236 = vmatpush1.msra.mxu0 0.0
  %237 = vmatprep.subr.mxu0 0.0
  %238 = vmatpush1.msra.mxu0 0.0
  %239 = vmatprep.subr.mxu0 0.0
  %240 = vmatpush1.msra.mxu0 0.0
  %241 = vmatprep.subr.mxu0 0.0
  %242 = vmatpush1.msra.mxu0 0.0
  %243 = vmatprep.subr.mxu0 0.0
  %244 = vmatpush1.msra.mxu0 0.0
  %245 = vmatprep.subr.mxu0 0.0
  %246 = vmatpush1.msra.mxu0 0.0
  %247 = vmatprep.subr.mxu0 0.0
  %248 = vmatpush1.msra.mxu0 0.0
  %249 = vmatprep.subr.mxu0 0.0
  %250 = vmatpush1.msra.mxu0 0.0
  %251 = vmatprep.subr.mxu0 0.0
  %252 = vmatpush1.msra.mxu0 0.0
  %253 = vmatprep.subr.mxu0 0.0
  %254 = vmatpush1.msra.mxu0 0.0
  %255 = vmatprep.subr.mxu0 0.0
  %256 = vmatpush1.msra.mxu0 0.0
  %257 = vmatprep.subr.mxu0 0.0
  %258 = vmatpush1.msra.mxu0 0.0
  %259 = vmatprep.subr.mxu0 0.0
  %260 = vmatpush1.msra.mxu0 0.0
  %261 = vmatprep.subr.mxu0 0.0
  %262 = vmatpush1.msra.mxu0 0.0
  %263 = vmatprep.subr.mxu0 0.0
  %264 = vmatpush1.msra.mxu0 0.0
  %265 = vmatprep.subr.mxu0 0.0
  %266 = vmatpush1.msra.mxu0 0.0
  %267 = vmatprep.subr.mxu0 0.0
  %268 = vmatpush1.msra.mxu0 0.0
  %269 = vmatprep.mubr.f32.mxu0 0.0
  %270 = vmatmul.mubr.f32.gmra.mrb[0].mxu0 %v203
  %v271 = vpop.f32.mrb[0].mxu0
  %v272 = vadd.f32 0.0, %v271
  %v273 = vpop.f32.mrb[0].mxu0
  %274 = vmatprep.mubr.f32.mxu0 0.0
  %275 = vmatmul.mubr.f32.gmra.mrb[0].mxu0 %v203
  %v276 = vpop.f32.mrb[0].mxu0
  %v277 = vpop.f32.mrb[0].mxu0
  %v278 = vadd.f32 0.0, %v277
  %279 = vdwg.mxu0
  %v280 = vld [vmem:[#allocation2] sm:$0xff]
  %v281 = vadd.f32 %v280, %v272
  %s282 = scalar_lea.vmem [#allocation2], 112
  %v283 = vld [vmem:[%s282 + $0x8] sm:$0xff]
  %v284 = vadd.f32 %v283, %v278
  %v285 = vxor.u32 %v281, 2147483648
  %v286 = vxor.u32 %v284, 2147483648
  %v287 = vmul.f32 %v285, 1.442695
  %v288 = vpow.pop %v287
  %v289 = vmul.f32 %v286, 1.442695
  %v290 = vpow.pop %v289
  %v291 = vadd.f32 %v288, 1.0
  %v292 = vadd.f32 %v290, 1.0
  %v293 = vrcp.pop %v291
  %v294 = vmul.f32 1.0, %v293
  %v295 = vrcp.pop %v292
  %v296 = vmul.f32 1.0, %v295
  %v297 = vtanh.pop %v281
  %v298 = vtanh.pop %v284
  %v299 = vmul.f32 %v294, 0.0
  %v300 = vmul.f32 %v296, 0.0
  %303 = vrot.lane.b32.xlu0 %v297, 64
  %v304 = vpop.permute.xlu0 %303
  %305 = vrot.lane.b32.xlu0 %v298, 64
  %v306 = vpop.permute.xlu0 %305
  %v309 = vmul.f32 %v294, %v304
  %v310 = vmul.f32 %v296, %v306
  %313 = vrot.lane.b32.xlu0 %v309, 32
  %v314 = vpop.permute.xlu0 %313
  %315 = vrot.lane.b32.xlu0 %v310, 32
  %v316 = vpop.permute.xlu0 %315
  %v319 = vadd.f32 %v299, %v314
  %v320 = vadd.f32 %v300, %v316
  %v321 = vtanh.pop %v319
  %v322 = vtanh.pop %v320
  %325 = vrot.lane.b32.xlu0 %v321, 64
  %v326 = vpop.permute.xlu0 %325
  %327 = vrot.lane.b32.xlu0 %v322, 64
  %v328 = vpop.permute.xlu0 %327
  %v331 = vmul.f32 %v294, %v326
  %v332 = vmul.f32 %v296, %v328
  %334 = vrot.lane.b32.xlu0 %v331, 32
  %v335 = vpop.permute.xlu0 %334
  %337 = vst.msk [vmem:[%s6] sm:$0xff] %vm92, %v335
  %339 = vrot.lane.b32.xlu0 %v332, 32
  %v340 = vpop.permute.xlu0 %339
  %s342 = scalar_lea.vmem %s7, 56
  %343 = vst.msk [vmem:[%s342] sm:$0xff] %vm92, %v340
  %v344 = vsel %vm92, %v335, 0
  %v346 = vsel %vm92, %v340, 0
  %348 = vmatprep.subr.mxu0 %v195
  %349 = vmatpush1.msra.mxu0 %v194
  %350 = vmatprep.subr.mxu0 %v197
  %351 = vmatpush1.msra.mxu0 %v196
  %352 = vmatprep.subr.mxu0 %v199
  %353 = vmatpush1.msra.mxu0 %v198
  %354 = vmatprep.subr.mxu0 %v201
  %355 = vmatpush1.msra.mxu0 %v200
  %356 = vmatprep.subr.mxu0 0.0
  %357 = vmatpush1.msra.mxu0 0.0
  %358 = vmatprep.subr.mxu0 0.0
  %359 = vmatpush1.msra.mxu0 0.0
  %360 = vmatprep.subr.mxu0 0.0
  %361 = vmatpush1.msra.mxu0 0.0
  %362 = vmatprep.subr.mxu0 0.0
  %363 = vmatpush1.msra.mxu0 0.0
  %364 = vmatprep.subr.mxu0 0.0
  %365 = vmatpush1.msra.mxu0 0.0
  %366 = vmatprep.subr.mxu0 0.0
  %367 = vmatpush1.msra.mxu0 0.0
  %368 = vmatprep.subr.mxu0 0.0
  %369 = vmatpush1.msra.mxu0 0.0
  %370 = vmatprep.subr.mxu0 0.0
  %371 = vmatpush1.msra.mxu0 0.0
  %372 = vmatprep.subr.mxu0 0.0
  %373 = vmatpush1.msra.mxu0 0.0
  %374 = vmatprep.subr.mxu0 0.0
  %375 = vmatpush1.msra.mxu0 0.0
  %376 = vmatprep.subr.mxu0 0.0
  %377 = vmatpush1.msra.mxu0 0.0
  %378 = vmatprep.subr.mxu0 0.0
  %379 = vmatpush1.msra.mxu0 0.0
  %380 = vmatprep.subr.mxu0 0.0
  %381 = vmatpush1.msra.mxu0 0.0
  %382 = vmatprep.subr.mxu0 0.0
  %383 = vmatpush1.msra.mxu0 0.0
  %384 = vmatprep.subr.mxu0 0.0
  %385 = vmatpush1.msra.mxu0 0.0
  %386 = vmatprep.subr.mxu0 0.0
  %387 = vmatpush1.msra.mxu0 0.0
  %388 = vmatprep.subr.mxu0 0.0
  %389 = vmatpush1.msra.mxu0 0.0
  %390 = vmatprep.subr.mxu0 0.0
  %391 = vmatpush1.msra.mxu0 0.0
  %392 = vmatprep.subr.mxu0 0.0
  %393 = vmatpush1.msra.mxu0 0.0
  %394 = vmatprep.subr.mxu0 0.0
  %395 = vmatpush1.msra.mxu0 0.0
  %396 = vmatprep.subr.mxu0 0.0
  %397 = vmatpush1.msra.mxu0 0.0
  %398 = vmatprep.subr.mxu0 0.0
  %399 = vmatpush1.msra.mxu0 0.0
  %400 = vmatprep.subr.mxu0 0.0
  %401 = vmatpush1.msra.mxu0 0.0
  %402 = vmatprep.subr.mxu0 0.0
  %403 = vmatpush1.msra.mxu0 0.0
  %404 = vmatprep.subr.mxu0 0.0
  %405 = vmatpush1.msra.mxu0 0.0
  %406 = vmatprep.subr.mxu0 0.0
  %407 = vmatpush1.msra.mxu0 0.0
  %408 = vmatprep.subr.mxu0 0.0
  %409 = vmatpush1.msra.mxu0 0.0
  %410 = vmatprep.subr.mxu0 0.0
  %411 = vmatpush1.msra.mxu0 0.0
  %412 = vmatprep.mubr.f32.mxu0 0.0
  %413 = vmatmul.mubr.f32.gmra.mrb[0].mxu0 %v344
  %v414 = vpop.f32.mrb[0].mxu0
  %v415 = vadd.f32 0.0, %v414
  %v416 = vpop.f32.mrb[0].mxu0
  %417 = vmatprep.mubr.f32.mxu0 0.0
  %418 = vmatmul.mubr.f32.gmra.mrb[0].mxu0 %v346
  %v419 = vpop.f32.mrb[0].mxu0
  %v420 = vpop.f32.mrb[0].mxu0
  %v421 = vadd.f32 0.0, %v420
  %422 = vdwg.mxu0
  %s423 = scalar_lea.vmem [#allocation2], 16
  %v424 = vld [vmem:[%s423] sm:$0xff]
  %v425 = vadd.f32 %v424, %v415
  %s426 = scalar_lea.vmem [#allocation2], 96
  %v427 = vld [vmem:[%s426 + $0x8] sm:$0xff]
  %v428 = vadd.f32 %v427, %v421
  %v429 = vxor.u32 %v425, 2147483648
  %v430 = vxor.u32 %v428, 2147483648
  %v431 = vmul.f32 %v429, 1.442695
  %v432 = vpow.pop %v431
  %v433 = vmul.f32 %v430, 1.442695
  %v434 = vpow.pop %v433
  %v435 = vadd.f32 %v432, 1.0
  %v436 = vadd.f32 %v434, 1.0
  %v437 = vrcp.pop %v435
  %v438 = vmul.f32 1.0, %v437
  %v439 = vrcp.pop %v436
  %v440 = vmul.f32 1.0, %v439
  %v441 = vtanh.pop %v425
  %v442 = vtanh.pop %v428
  %v443 = vmul.f32 %v438, %v319
  %v444 = vmul.f32 %v440, %v320
  %447 = vrot.lane.b32.xlu0 %v441, 64
  %v448 = vpop.permute.xlu0 %447
  %449 = vrot.lane.b32.xlu0 %v442, 64
  %v450 = vpop.permute.xlu0 %449
  %v453 = vmul.f32 %v438, %v448
  %v454 = vmul.f32 %v440, %v450
  %457 = vrot.lane.b32.xlu0 %v453, 32
  %v458 = vpop.permute.xlu0 %457
  %459 = vrot.lane.b32.xlu0 %v454, 32
  %v460 = vpop.permute.xlu0 %459
  %v463 = vadd.f32 %v443, %v458
  %v464 = vadd.f32 %v444, %v460
  %v465 = vtanh.pop %v463
  %v466 = vtanh.pop %v464
  %469 = vrot.lane.b32.xlu0 %v465, 64
  %v470 = vpop.permute.xlu0 %469
  %471 = vrot.lane.b32.xlu0 %v466, 64
  %v472 = vpop.permute.xlu0 %471
  %v475 = vmul.f32 %v438, %v470
  %v476 = vmul.f32 %v440, %v472
  %478 = vrot.lane.b32.xlu0 %v475, 32
  %v479 = vpop.permute.xlu0 %478
  %s481 = scalar_lea.vmem %s6, 8
  %482 = vst.msk [vmem:[%s481] sm:$0xff] %vm92, %v479
  %484 = vrot.lane.b32.xlu0 %v476, 32
  %v485 = vpop.permute.xlu0 %484
  %s487 = scalar_lea.vmem %s7, 48
  %488 = vst.msk [vmem:[%s487] sm:$0xff] %vm92, %v485
  %v489 = vsel %vm92, %v479, 0
  %v491 = vsel %vm92, %v485, 0
  %493 = vmatprep.subr.mxu0 %v195
  %494 = vmatpush1.msra.mxu0 %v194
  %495 = vmatprep.subr.mxu0 %v197
  %496 = vmatpush1.msra.mxu0 %v196
  %497 = vmatprep.subr.mxu0 %v199
  %498 = vmatpush1.msra.mxu0 %v198
  %499 = vmatprep.subr.mxu0 %v201
  %500 = vmatpush1.msra.mxu0 %v200
  %501 = vmatprep.subr.mxu0 0.0
  %502 = vmatpush1.msra.mxu0 0.0
  %503 = vmatprep.subr.mxu0 0.0
  %504 = vmatpush1.msra.mxu0 0.0
  %505 = vmatprep.subr.mxu0 0.0
  %506 = vmatpush1.msra.mxu0 0.0
  %507 = vmatprep.subr.mxu0 0.0
  %508 = vmatpush1.msra.mxu0 0.0
  %509 = vmatprep.subr.mxu0 0.0
  %510 = vmatpush1.msra.mxu0 0.0
  %511 = vmatprep.subr.mxu0 0.0
  %512 = vmatpush1.msra.mxu0 0.0
  %513 = vmatprep.subr.mxu0 0.0
  %514 = vmatpush1.msra.mxu0 0.0
  %515 = vmatprep.subr.mxu0 0.0
  %516 = vmatpush1.msra.mxu0 0.0
  %517 = vmatprep.subr.mxu0 0.0
  %518 = vmatpush1.msra.mxu0 0.0
  %519 = vmatprep.subr.mxu0 0.0
  %520 = vmatpush1.msra.mxu0 0.0
  %521 = vmatprep.subr.mxu0 0.0
  %522 = vmatpush1.msra.mxu0 0.0
  %523 = vmatprep.subr.mxu0 0.0
  %524 = vmatpush1.msra.mxu0 0.0
  %525 = vmatprep.subr.mxu0 0.0
  %526 = vmatpush1.msra.mxu0 0.0
  %527 = vmatprep.subr.mxu0 0.0
  %528 = vmatpush1.msra.mxu0 0.0
  %529 = vmatprep.subr.mxu0 0.0
  %530 = vmatpush1.msra.mxu0 0.0
  %531 = vmatprep.subr.mxu0 0.0
  %532 = vmatpush1.msra.mxu0 0.0
  %533 = vmatprep.subr.mxu0 0.0
  %534 = vmatpush1.msra.mxu0 0.0
  %535 = vmatprep.subr.mxu0 0.0
  %536 = vmatpush1.msra.mxu0 0.0
  %537 = vmatprep.subr.mxu0 0.0
  %538 = vmatpush1.msra.mxu0 0.0
  %539 = vmatprep.subr.mxu0 0.0
  %540 = vmatpush1.msra.mxu0 0.0
  %541 = vmatprep.subr.mxu0 0.0
  %542 = vmatpush1.msra.mxu0 0.0
  %543 = vmatprep.subr.mxu0 0.0
  %544 = vmatpush1.msra.mxu0 0.0
  %545 = vmatprep.subr.mxu0 0.0
  %546 = vmatpush1.msra.mxu0 0.0
  %547 = vmatprep.subr.mxu0 0.0
  %548 = vmatpush1.msra.mxu0 0.0
  %549 = vmatprep.subr.mxu0 0.0
  %550 = vmatpush1.msra.mxu0 0.0
  %551 = vmatprep.subr.mxu0 0.0
  %552 = vmatpush1.msra.mxu0 0.0
  %553 = vmatprep.subr.mxu0 0.0
  %554 = vmatpush1.msra.mxu0 0.0
  %555 = vmatprep.subr.mxu0 0.0
  %556 = vmatpush1.msra.mxu0 0.0
  %557 = vmatprep.mubr.f32.mxu0 0.0
  %558 = vmatmul.mubr.f32.gmra.mrb[0].mxu0 %v489
  %v559 = vpop.f32.mrb[0].mxu0
  %v560 = vadd.f32 0.0, %v559
  %v561 = vpop.f32.mrb[0].mxu0
  %562 = vmatprep.mubr.f32.mxu0 0.0
  %563 = vmatmul.mubr.f32.gmra.mrb[0].mxu0 %v491
  %v564 = vpop.f32.mrb[0].mxu0
  %v565 = vpop.f32.mrb[0].mxu0
  %v566 = vadd.f32 0.0, %v565
  %567 = vdwg.mxu0
  %s568 = scalar_lea.vmem [#allocation2], 32
  %v569 = vld [vmem:[%s568] sm:$0xff]
  %v570 = vadd.f32 %v569, %v560
  %s571 = scalar_lea.vmem [#allocation2], 80
  %v572 = vld [vmem:[%s571 + $0x8] sm:$0xff]
  %v573 = vadd.f32 %v572, %v566
  %v574 = vxor.u32 %v570, 2147483648
  %v575 = vxor.u32 %v573, 2147483648
  %v576 = vmul.f32 %v574, 1.442695
  %v577 = vpow.pop %v576
  %v578 = vmul.f32 %v575, 1.442695
  %v579 = vpow.pop %v578
  %v580 = vadd.f32 %v577, 1.0
  %v581 = vadd.f32 %v579, 1.0
  %v582 = vrcp.pop %v580
  %v583 = vmul.f32 1.0, %v582
  %v584 = vrcp.pop %v581
  %v585 = vmul.f32 1.0, %v584
  %v586 = vtanh.pop %v570
  %v587 = vtanh.pop %v573
  %v588 = vmul.f32 %v583, %v463
  %v589 = vmul.f32 %v585, %v464
  %592 = vrot.lane.b32.xlu0 %v586, 64
  %v593 = vpop.permute.xlu0 %592
  %594 = vrot.lane.b32.xlu0 %v587, 64
  %v595 = vpop.permute.xlu0 %594
  %v598 = vmul.f32 %v583, %v593
  %v599 = vmul.f32 %v585, %v595
  %602 = vrot.lane.b32.xlu0 %v598, 32
  %v603 = vpop.permute.xlu0 %602
  %604 = vrot.lane.b32.xlu0 %v599, 32
  %v605 = vpop.permute.xlu0 %604
  %v608 = vadd.f32 %v588, %v603
  %v609 = vadd.f32 %v589, %v605
  %v610 = vtanh.pop %v608
  %v611 = vtanh.pop %v609
  %614 = vrot.lane.b32.xlu0 %v610, 64
  %v615 = vpop.permute.xlu0 %614
  %616 = vrot.lane.b32.xlu0 %v611, 64
  %v617 = vpop.permute.xlu0 %616
  %v620 = vmul.f32 %v583, %v615
  %v621 = vmul.f32 %v585, %v617
  %623 = vrot.lane.b32.xlu0 %v620, 32
  %v624 = vpop.permute.xlu0 %623
  %s626 = scalar_lea.vmem %s6, 16
  %627 = vst.msk [vmem:[%s626] sm:$0xff] %vm92, %v624
  %629 = vrot.lane.b32.xlu0 %v621, 32
  %v630 = vpop.permute.xlu0 %629
  %s632 = scalar_lea.vmem %s7, 40
  %633 = vst.msk [vmem:[%s632] sm:$0xff] %vm92, %v630
  %v634 = vsel %vm92, %v624, 0
  %v636 = vsel %vm92, %v630, 0
  %638 = vmatprep.subr.mxu0 %v195
  %639 = vmatpush1.msra.mxu0 %v194
  %640 = vmatprep.subr.mxu0 %v197
  %641 = vmatpush1.msra.mxu0 %v196
  %642 = vmatprep.subr.mxu0 %v199
  %643 = vmatpush1.msra.mxu0 %v198
  %644 = vmatprep.subr.mxu0 %v201
  %645 = vmatpush1.msra.mxu0 %v200
  %646 = vmatprep.subr.mxu0 0.0
  %647 = vmatpush1.msra.mxu0 0.0
  %648 = vmatprep.subr.mxu0 0.0
  %649 = vmatpush1.msra.mxu0 0.0
  %650 = vmatprep.subr.mxu0 0.0
  %651 = vmatpush1.msra.mxu0 0.0
  %652 = vmatprep.subr.mxu0 0.0
  %653 = vmatpush1.msra.mxu0 0.0
  %654 = vmatprep.subr.mxu0 0.0
  %655 = vmatpush1.msra.mxu0 0.0
  %656 = vmatprep.subr.mxu0 0.0
  %657 = vmatpush1.msra.mxu0 0.0
  %658 = vmatprep.subr.mxu0 0.0
  %659 = vmatpush1.msra.mxu0 0.0
  %660 = vmatprep.subr.mxu0 0.0
  %661 = vmatpush1.msra.mxu0 0.0
  %662 = vmatprep.subr.mxu0 0.0
  %663 = vmatpush1.msra.mxu0 0.0
  %664 = vmatprep.subr.mxu0 0.0
  %665 = vmatpush1.msra.mxu0 0.0
  %666 = vmatprep.subr.mxu0 0.0
  %667 = vmatpush1.msra.mxu0 0.0
  %668 = vmatprep.subr.mxu0 0.0
  %669 = vmatpush1.msra.mxu0 0.0
  %670 = vmatprep.subr.mxu0 0.0
  %671 = vmatpush1.msra.mxu0 0.0
  %672 = vmatprep.subr.mxu0 0.0
  %673 = vmatpush1.msra.mxu0 0.0
  %674 = vmatprep.subr.mxu0 0.0
  %675 = vmatpush1.msra.mxu0 0.0
  %676 = vmatprep.subr.mxu0 0.0
  %677 = vmatpush1.msra.mxu0 0.0
  %678 = vmatprep.subr.mxu0 0.0
  %679 = vmatpush1.msra.mxu0 0.0
  %680 = vmatprep.subr.mxu0 0.0
  %681 = vmatpush1.msra.mxu0 0.0
  %682 = vmatprep.subr.mxu0 0.0
  %683 = vmatpush1.msra.mxu0 0.0
  %684 = vmatprep.subr.mxu0 0.0
  %685 = vmatpush1.msra.mxu0 0.0
  %686 = vmatprep.subr.mxu0 0.0
  %687 = vmatpush1.msra.mxu0 0.0
  %688 = vmatprep.subr.mxu0 0.0
  %689 = vmatpush1.msra.mxu0 0.0
  %690 = vmatprep.subr.mxu0 0.0
  %691 = vmatpush1.msra.mxu0 0.0
  %692 = vmatprep.subr.mxu0 0.0
  %693 = vmatpush1.msra.mxu0 0.0
  %694 = vmatprep.subr.mxu0 0.0
  %695 = vmatpush1.msra.mxu0 0.0
  %696 = vmatprep.subr.mxu0 0.0
  %697 = vmatpush1.msra.mxu0 0.0
  %698 = vmatprep.subr.mxu0 0.0
  %699 = vmatpush1.msra.mxu0 0.0
  %700 = vmatprep.subr.mxu0 0.0
  %701 = vmatpush1.msra.mxu0 0.0
  %702 = vmatprep.mubr.f32.mxu0 0.0
  %703 = vmatmul.mubr.f32.gmra.mrb[0].mxu0 %v634
  %v704 = vpop.f32.mrb[0].mxu0
  %v705 = vadd.f32 0.0, %v704
  %v706 = vpop.f32.mrb[0].mxu0
  %707 = vmatprep.mubr.f32.mxu0 0.0
  %708 = vmatmul.mubr.f32.gmra.mrb[0].mxu0 %v636
  %v709 = vpop.f32.mrb[0].mxu0
  %v710 = vpop.f32.mrb[0].mxu0
  %v711 = vadd.f32 0.0, %v710
  %712 = vdwg.mxu0
  %s713 = scalar_lea.vmem [#allocation2], 48
  %v714 = vld [vmem:[%s713] sm:$0xff]
  %v715 = vadd.f32 %v714, %v705
  %s716 = scalar_lea.vmem [#allocation2], 64
  %v717 = vld [vmem:[%s716 + $0x8] sm:$0xff]
  %v718 = vadd.f32 %v717, %v711
  %v719 = vxor.u32 %v715, 2147483648
  %v720 = vxor.u32 %v718, 2147483648
  %v721 = vmul.f32 %v719, 1.442695
  %v722 = vpow.pop %v721
  %v723 = vmul.f32 %v720, 1.442695
  %v724 = vpow.pop %v723
  %v725 = vadd.f32 %v722, 1.0
  %v726 = vadd.f32 %v724, 1.0
  %v727 = vrcp.pop %v725
  %v728 = vmul.f32 1.0, %v727
  %v729 = vrcp.pop %v726
  %v730 = vmul.f32 1.0, %v729
  %v731 = vtanh.pop %v715
  %v732 = vtanh.pop %v718
  %v733 = vmul.f32 %v728, %v608
  %v734 = vmul.f32 %v730, %v609
  %737 = vrot.lane.b32.xlu0 %v731, 64
  %v738 = vpop.permute.xlu0 %737
  %739 = vrot.lane.b32.xlu0 %v732, 64
  %v740 = vpop.permute.xlu0 %739
  %v743 = vmul.f32 %v728, %v738
  %v744 = vmul.f32 %v730, %v740
  %747 = vrot.lane.b32.xlu0 %v743, 32
  %v748 = vpop.permute.xlu0 %747
  %749 = vrot.lane.b32.xlu0 %v744, 32
  %v750 = vpop.permute.xlu0 %749
  %v753 = vadd.f32 %v733, %v748
  %v754 = vadd.f32 %v734, %v750
  %v755 = vtanh.pop %v753
  %v756 = vtanh.pop %v754
  %759 = vrot.lane.b32.xlu0 %v755, 64
  %v760 = vpop.permute.xlu0 %759
  %761 = vrot.lane.b32.xlu0 %v756, 64
  %v762 = vpop.permute.xlu0 %761
  %v765 = vmul.f32 %v728, %v760
  %v766 = vmul.f32 %v730, %v762
  %768 = vrot.lane.b32.xlu0 %v765, 32
  %v769 = vpop.permute.xlu0 %768
  %s771 = scalar_lea.vmem %s6, 24
  %772 = vst.msk [vmem:[%s771] sm:$0xff] %vm92, %v769
  %774 = vrot.lane.b32.xlu0 %v766, 32
  %v775 = vpop.permute.xlu0 %774
  %s777 = scalar_lea.vmem %s7, 32
  %778 = vst.msk [vmem:[%s777] sm:$0xff] %vm92, %v775
  %v779 = vsel %vm92, %v769, 0
  %v781 = vsel %vm92, %v775, 0
  %783 = vmatprep.subr.mxu0 %v195
  %784 = vmatpush1.msra.mxu0 %v194
  %785 = vmatprep.subr.mxu0 %v197
  %786 = vmatpush1.msra.mxu0 %v196
  %787 = vmatprep.subr.mxu0 %v199
  %788 = vmatpush1.msra.mxu0 %v198
  %789 = vmatprep.subr.mxu0 %v201
  %790 = vmatpush1.msra.mxu0 %v200
  %791 = vmatprep.subr.mxu0 0.0
  %792 = vmatpush1.msra.mxu0 0.0
  %793 = vmatprep.subr.mxu0 0.0
  %794 = vmatpush1.msra.mxu0 0.0
  %795 = vmatprep.subr.mxu0 0.0
  %796 = vmatpush1.msra.mxu0 0.0
  %797 = vmatprep.subr.mxu0 0.0
  %798 = vmatpush1.msra.mxu0 0.0
  %799 = vmatprep.subr.mxu0 0.0
  %800 = vmatpush1.msra.mxu0 0.0
  %801 = vmatprep.subr.mxu0 0.0
  %802 = vmatpush1.msra.mxu0 0.0
  %803 = vmatprep.subr.mxu0 0.0
  %804 = vmatpush1.msra.mxu0 0.0
  %805 = vmatprep.subr.mxu0 0.0
  %806 = vmatpush1.msra.mxu0 0.0
  %807 = vmatprep.subr.mxu0 0.0
  %808 = vmatpush1.msra.mxu0 0.0
  %809 = vmatprep.subr.mxu0 0.0
  %810 = vmatpush1.msra.mxu0 0.0
  %811 = vmatprep.subr.mxu0 0.0
  %812 = vmatpush1.msra.mxu0 0.0
  %813 = vmatprep.subr.mxu0 0.0
  %814 = vmatpush1.msra.mxu0 0.0
  %815 = vmatprep.subr.mxu0 0.0
  %816 = vmatpush1.msra.mxu0 0.0
  %817 = vmatprep.subr.mxu0 0.0
  %818 = vmatpush1.msra.mxu0 0.0
  %819 = vmatprep.subr.mxu0 0.0
  %820 = vmatpush1.msra.mxu0 0.0
  %821 = vmatprep.subr.mxu0 0.0
  %822 = vmatpush1.msra.mxu0 0.0
  %823 = vmatprep.subr.mxu0 0.0
  %824 = vmatpush1.msra.mxu0 0.0
  %825 = vmatprep.subr.mxu0 0.0
  %826 = vmatpush1.msra.mxu0 0.0
  %827 = vmatprep.subr.mxu0 0.0
  %828 = vmatpush1.msra.mxu0 0.0
  %829 = vmatprep.subr.mxu0 0.0
  %830 = vmatpush1.msra.mxu0 0.0
  %831 = vmatprep.subr.mxu0 0.0
  %832 = vmatpush1.msra.mxu0 0.0
  %833 = vmatprep.subr.mxu0 0.0
  %834 = vmatpush1.msra.mxu0 0.0
  %835 = vmatprep.subr.mxu0 0.0
  %836 = vmatpush1.msra.mxu0 0.0
  %837 = vmatprep.subr.mxu0 0.0
  %838 = vmatpush1.msra.mxu0 0.0
  %839 = vmatprep.subr.mxu0 0.0
  %840 = vmatpush1.msra.mxu0 0.0
  %841 = vmatprep.subr.mxu0 0.0
  %842 = vmatpush1.msra.mxu0 0.0
  %843 = vmatprep.subr.mxu0 0.0
  %844 = vmatpush1.msra.mxu0 0.0
  %845 = vmatprep.subr.mxu0 0.0
  %846 = vmatpush1.msra.mxu0 0.0
  %847 = vmatprep.mubr.f32.mxu0 0.0
  %848 = vmatmul.mubr.f32.gmra.mrb[0].mxu0 %v779
  %v849 = vpop.f32.mrb[0].mxu0
  %v850 = vadd.f32 0.0, %v849
  %v851 = vpop.f32.mrb[0].mxu0
  %852 = vmatprep.mubr.f32.mxu0 0.0
  %853 = vmatmul.mubr.f32.gmra.mrb[0].mxu0 %v781
  %v854 = vpop.f32.mrb[0].mxu0
  %v855 = vpop.f32.mrb[0].mxu0
  %v856 = vadd.f32 0.0, %v855
  %857 = vdwg.mxu0
  %v858 = vld [vmem:[%s716] sm:$0xff]
  %v859 = vadd.f32 %v858, %v850
  %v860 = vld [vmem:[%s713 + $0x8] sm:$0xff]
  %v861 = vadd.f32 %v860, %v856
  %v862 = vxor.u32 %v859, 2147483648
  %v863 = vxor.u32 %v861, 2147483648
  %v864 = vmul.f32 %v862, 1.442695
  %v865 = vpow.pop %v864
  %v866 = vmul.f32 %v863, 1.442695
  %v867 = vpow.pop %v866
  %v868 = vadd.f32 %v865, 1.0
  %v869 = vadd.f32 %v867, 1.0
  %v870 = vrcp.pop %v868
  %v871 = vmul.f32 1.0, %v870
  %v872 = vrcp.pop %v869
  %v873 = vmul.f32 1.0, %v872
  %v874 = vtanh.pop %v859
  %v875 = vtanh.pop %v861
  %v876 = vmul.f32 %v871, %v753
  %v877 = vmul.f32 %v873, %v754
  %880 = vrot.lane.b32.xlu0 %v874, 64
  %v881 = vpop.permute.xlu0 %880
  %882 = vrot.lane.b32.xlu0 %v875, 64
  %v883 = vpop.permute.xlu0 %882
  %v886 = vmul.f32 %v871, %v881
  %v887 = vmul.f32 %v873, %v883
  %890 = vrot.lane.b32.xlu0 %v886, 32
  %v891 = vpop.permute.xlu0 %890
  %892 = vrot.lane.b32.xlu0 %v887, 32
  %v893 = vpop.permute.xlu0 %892
  %v896 = vadd.f32 %v876, %v891
  %v897 = vadd.f32 %v877, %v893
  %v898 = vtanh.pop %v896
  %v899 = vtanh.pop %v897
  %902 = vrot.lane.b32.xlu0 %v898, 64
  %v903 = vpop.permute.xlu0 %902
  %904 = vrot.lane.b32.xlu0 %v899, 64
  %v905 = vpop.permute.xlu0 %904
  %v908 = vmul.f32 %v871, %v903
  %v909 = vmul.f32 %v873, %v905
  %911 = vrot.lane.b32.xlu0 %v908, 32
  %v912 = vpop.permute.xlu0 %911
  %s914 = scalar_lea.vmem %s6, 32
  %915 = vst.msk [vmem:[%s914] sm:$0xff] %vm92, %v912
  %917 = vrot.lane.b32.xlu0 %v909, 32
  %v918 = vpop.permute.xlu0 %917
  %s920 = scalar_lea.vmem %s7, 24
  %921 = vst.msk [vmem:[%s920] sm:$0xff] %vm92, %v918
  %v922 = vsel %vm92, %v912, 0
  %v924 = vsel %vm92, %v918, 0
  %926 = vmatprep.subr.mxu0 %v195
  %927 = vmatpush1.msra.mxu0 %v194
  %928 = vmatprep.subr.mxu0 %v197
  %929 = vmatpush1.msra.mxu0 %v196
  %930 = vmatprep.subr.mxu0 %v199
  %931 = vmatpush1.msra.mxu0 %v198
  %932 = vmatprep.subr.mxu0 %v201
  %933 = vmatpush1.msra.mxu0 %v200
  %934 = vmatprep.subr.mxu0 0.0
  %935 = vmatpush1.msra.mxu0 0.0
  %936 = vmatprep.subr.mxu0 0.0
  %937 = vmatpush1.msra.mxu0 0.0
  %938 = vmatprep.subr.mxu0 0.0
  %939 = vmatpush1.msra.mxu0 0.0
  %940 = vmatprep.subr.mxu0 0.0
  %941 = vmatpush1.msra.mxu0 0.0
  %942 = vmatprep.subr.mxu0 0.0
  %943 = vmatpush1.msra.mxu0 0.0
  %944 = vmatprep.subr.mxu0 0.0
  %945 = vmatpush1.msra.mxu0 0.0
  %946 = vmatprep.subr.mxu0 0.0
  %947 = vmatpush1.msra.mxu0 0.0
  %948 = vmatprep.subr.mxu0 0.0
  %949 = vmatpush1.msra.mxu0 0.0
  %950 = vmatprep.subr.mxu0 0.0
  %951 = vmatpush1.msra.mxu0 0.0
  %952 = vmatprep.subr.mxu0 0.0
  %953 = vmatpush1.msra.mxu0 0.0
  %954 = vmatprep.subr.mxu0 0.0
  %955 = vmatpush1.msra.mxu0 0.0
  %956 = vmatprep.subr.mxu0 0.0
  %957 = vmatpush1.msra.mxu0 0.0
  %958 = vmatprep.subr.mxu0 0.0
  %959 = vmatpush1.msra.mxu0 0.0
  %960 = vmatprep.subr.mxu0 0.0
  %961 = vmatpush1.msra.mxu0 0.0
  %962 = vmatprep.subr.mxu0 0.0
  %963 = vmatpush1.msra.mxu0 0.0
  %964 = vmatprep.subr.mxu0 0.0
  %965 = vmatpush1.msra.mxu0 0.0
  %966 = vmatprep.subr.mxu0 0.0
  %967 = vmatpush1.msra.mxu0 0.0
  %968 = vmatprep.subr.mxu0 0.0
  %969 = vmatpush1.msra.mxu0 0.0
  %970 = vmatprep.subr.mxu0 0.0
  %971 = vmatpush1.msra.mxu0 0.0
  %972 = vmatprep.subr.mxu0 0.0
  %973 = vmatpush1.msra.mxu0 0.0
  %974 = vmatprep.subr.mxu0 0.0
  %975 = vmatpush1.msra.mxu0 0.0
  %976 = vmatprep.subr.mxu0 0.0
  %977 = vmatpush1.msra.mxu0 0.0
  %978 = vmatprep.subr.mxu0 0.0
  %979 = vmatpush1.msra.mxu0 0.0
  %980 = vmatprep.subr.mxu0 0.0
  %981 = vmatpush1.msra.mxu0 0.0
  %982 = vmatprep.subr.mxu0 0.0
  %983 = vmatpush1.msra.mxu0 0.0
  %984 = vmatprep.subr.mxu0 0.0
  %985 = vmatpush1.msra.mxu0 0.0
  %986 = vmatprep.subr.mxu0 0.0
  %987 = vmatpush1.msra.mxu0 0.0
  %988 = vmatprep.subr.mxu0 0.0
  %989 = vmatpush1.msra.mxu0 0.0
  %990 = vmatprep.mubr.f32.mxu0 0.0
  %991 = vmatmul.mubr.f32.gmra.mrb[0].mxu0 %v922
  %v992 = vpop.f32.mrb[0].mxu0
  %v993 = vadd.f32 0.0, %v992
  %v994 = vpop.f32.mrb[0].mxu0
  %995 = vmatprep.mubr.f32.mxu0 0.0
  %996 = vmatmul.mubr.f32.gmra.mrb[0].mxu0 %v924
  %v997 = vpop.f32.mrb[0].mxu0
  %v998 = vpop.f32.mrb[0].mxu0
  %v999 = vadd.f32 0.0, %v998
  %1000 = vdwg.mxu0
  %v1001 = vld [vmem:[%s571] sm:$0xff]
  %v1002 = vadd.f32 %v1001, %v993
  %v1003 = vld [vmem:[%s568 + $0x8] sm:$0xff]
  %v1004 = vadd.f32 %v1003, %v999
  %v1005 = vxor.u32 %v1002, 2147483648
  %v1006 = vxor.u32 %v1004, 2147483648
  %v1007 = vmul.f32 %v1005, 1.442695
  %v1008 = vpow.pop %v1007
  %v1009 = vmul.f32 %v1006, 1.442695
  %v1010 = vpow.pop %v1009
  %v1011 = vadd.f32 %v1008, 1.0
  %v1012 = vadd.f32 %v1010, 1.0
  %v1013 = vrcp.pop %v1011
  %v1014 = vmul.f32 1.0, %v1013
  %v1015 = vrcp.pop %v1012
  %v1016 = vmul.f32 1.0, %v1015
  %v1017 = vtanh.pop %v1002
  %v1018 = vtanh.pop %v1004
  %v1019 = vmul.f32 %v1014, %v896
  %v1020 = vmul.f32 %v1016, %v897
  %1023 = vrot.lane.b32.xlu0 %v1017, 64
  %v1024 = vpop.permute.xlu0 %1023
  %1025 = vrot.lane.b32.xlu0 %v1018, 64
  %v1026 = vpop.permute.xlu0 %1025
  %v1029 = vmul.f32 %v1014, %v1024
  %v1030 = vmul.f32 %v1016, %v1026
  %1033 = vrot.lane.b32.xlu0 %v1029, 32
  %v1034 = vpop.permute.xlu0 %1033
  %1035 = vrot.lane.b32.xlu0 %v1030, 32
  %v1036 = vpop.permute.xlu0 %1035
  %v1039 = vadd.f32 %v1019, %v1034
  %v1040 = vadd.f32 %v1020, %v1036
  %v1041 = vtanh.pop %v1039
  %v1042 = vtanh.pop %v1040
  %1045 = vrot.lane.b32.xlu0 %v1041, 64
  %v1046 = vpop.permute.xlu0 %1045
  %1047 = vrot.lane.b32.xlu0 %v1042, 64
  %v1048 = vpop.permute.xlu0 %1047
  %v1051 = vmul.f32 %v1014, %v1046
  %v1052 = vmul.f32 %v1016, %v1048
  %1054 = vrot.lane.b32.xlu0 %v1051, 32
  %v1055 = vpop.permute.xlu0 %1054
  %s1057 = scalar_lea.vmem %s6, 40
  %1058 = vst.msk [vmem:[%s1057] sm:$0xff] %vm92, %v1055
  %1060 = vrot.lane.b32.xlu0 %v1052, 32
  %v1061 = vpop.permute.xlu0 %1060
  %s1063 = scalar_lea.vmem %s7, 16
  %1064 = vst.msk [vmem:[%s1063] sm:$0xff] %vm92, %v1061
  %v1065 = vsel %vm92, %v1055, 0
  %v1067 = vsel %vm92, %v1061, 0
  %1069 = vmatprep.subr.mxu0 %v195
  %1070 = vmatpush1.msra.mxu0 %v194
  %1071 = vmatprep.subr.mxu0 %v197
  %1072 = vmatpush1.msra.mxu0 %v196
  %1073 = vmatprep.subr.mxu0 %v199
  %1074 = vmatpush1.msra.mxu0 %v198
  %1075 = vmatprep.subr.mxu0 %v201
  %1076 = vmatpush1.msra.mxu0 %v200
  %1077 = vmatprep.subr.mxu0 0.0
  %1078 = vmatpush1.msra.mxu0 0.0
  %1079 = vmatprep.subr.mxu0 0.0
  %1080 = vmatpush1.msra.mxu0 0.0
  %1081 = vmatprep.subr.mxu0 0.0
  %1082 = vmatpush1.msra.mxu0 0.0
  %1083 = vmatprep.subr.mxu0 0.0
  %1084 = vmatpush1.msra.mxu0 0.0
  %1085 = vmatprep.subr.mxu0 0.0
  %1086 = vmatpush1.msra.mxu0 0.0
  %1087 = vmatprep.subr.mxu0 0.0
  %1088 = vmatpush1.msra.mxu0 0.0
  %1089 = vmatprep.subr.mxu0 0.0
  %1090 = vmatpush1.msra.mxu0 0.0
  %1091 = vmatprep.subr.mxu0 0.0
  %1092 = vmatpush1.msra.mxu0 0.0
  %1093 = vmatprep.subr.mxu0 0.0
  %1094 = vmatpush1.msra.mxu0 0.0
  %1095 = vmatprep.subr.mxu0 0.0
  %1096 = vmatpush1.msra.mxu0 0.0
  %1097 = vmatprep.subr.mxu0 0.0
  %1098 = vmatpush1.msra.mxu0 0.0
  %1099 = vmatprep.subr.mxu0 0.0
  %1100 = vmatpush1.msra.mxu0 0.0
  %1101 = vmatprep.subr.mxu0 0.0
  %1102 = vmatpush1.msra.mxu0 0.0
  %1103 = vmatprep.subr.mxu0 0.0
  %1104 = vmatpush1.msra.mxu0 0.0
  %1105 = vmatprep.subr.mxu0 0.0
  %1106 = vmatpush1.msra.mxu0 0.0
  %1107 = vmatprep.subr.mxu0 0.0
  %1108 = vmatpush1.msra.mxu0 0.0
  %1109 = vmatprep.subr.mxu0 0.0
  %1110 = vmatpush1.msra.mxu0 0.0
  %1111 = vmatprep.subr.mxu0 0.0
  %1112 = vmatpush1.msra.mxu0 0.0
  %1113 = vmatprep.subr.mxu0 0.0
  %1114 = vmatpush1.msra.mxu0 0.0
  %1115 = vmatprep.subr.mxu0 0.0
  %1116 = vmatpush1.msra.mxu0 0.0
  %1117 = vmatprep.subr.mxu0 0.0
  %1118 = vmatpush1.msra.mxu0 0.0
  %1119 = vmatprep.subr.mxu0 0.0
  %1120 = vmatpush1.msra.mxu0 0.0
  %1121 = vmatprep.subr.mxu0 0.0
  %1122 = vmatpush1.msra.mxu0 0.0
  %1123 = vmatprep.subr.mxu0 0.0
  %1124 = vmatpush1.msra.mxu0 0.0
  %1125 = vmatprep.subr.mxu0 0.0
  %1126 = vmatpush1.msra.mxu0 0.0
  %1127 = vmatprep.subr.mxu0 0.0
  %1128 = vmatpush1.msra.mxu0 0.0
  %1129 = vmatprep.subr.mxu0 0.0
  %1130 = vmatpush1.msra.mxu0 0.0
  %1131 = vmatprep.subr.mxu0 0.0
  %1132 = vmatpush1.msra.mxu0 0.0
  %1133 = vmatprep.mubr.f32.mxu0 0.0
  %1134 = vmatmul.mubr.f32.gmra.mrb[0].mxu0 %v1065
  %v1135 = vpop.f32.mrb[0].mxu0
  %v1136 = vadd.f32 0.0, %v1135
  %v1137 = vpop.f32.mrb[0].mxu0
  %1138 = vmatprep.mubr.f32.mxu0 0.0
  %1139 = vmatmul.mubr.f32.gmra.mrb[0].mxu0 %v1067
  %v1140 = vpop.f32.mrb[0].mxu0
  %v1141 = vpop.f32.mrb[0].mxu0
  %v1142 = vadd.f32 0.0, %v1141
  %1143 = vdwg.mxu0
  %v1144 = vld [vmem:[%s426] sm:$0xff]
  %v1145 = vadd.f32 %v1144, %v1136
  %v1146 = vld [vmem:[%s423 + $0x8] sm:$0xff]
  %v1147 = vadd.f32 %v1146, %v1142
  %v1148 = vxor.u32 %v1145, 2147483648
  %v1149 = vxor.u32 %v1147, 2147483648
  %v1150 = vmul.f32 %v1148, 1.442695
  %v1151 = vpow.pop %v1150
  %v1152 = vmul.f32 %v1149, 1.442695
  %v1153 = vpow.pop %v1152
  %v1154 = vadd.f32 %v1151, 1.0
  %v1155 = vadd.f32 %v1153, 1.0
  %v1156 = vrcp.pop %v1154
  %v1157 = vmul.f32 1.0, %v1156
  %v1158 = vrcp.pop %v1155
  %v1159 = vmul.f32 1.0, %v1158
  %v1160 = vtanh.pop %v1145
  %v1161 = vtanh.pop %v1147
  %v1162 = vmul.f32 %v1157, %v1039
  %v1163 = vmul.f32 %v1159, %v1040
  %1166 = vrot.lane.b32.xlu0 %v1160, 64
  %v1167 = vpop.permute.xlu0 %1166
  %1168 = vrot.lane.b32.xlu0 %v1161, 64
  %v1169 = vpop.permute.xlu0 %1168
  %v1172 = vmul.f32 %v1157, %v1167
  %v1173 = vmul.f32 %v1159, %v1169
  %1176 = vrot.lane.b32.xlu0 %v1172, 32
  %v1177 = vpop.permute.xlu0 %1176
  %1178 = vrot.lane.b32.xlu0 %v1173, 32
  %v1179 = vpop.permute.xlu0 %1178
  %v1182 = vadd.f32 %v1162, %v1177
  %v1183 = vadd.f32 %v1163, %v1179
  %v1184 = vtanh.pop %v1182
  %v1185 = vtanh.pop %v1183
  %1188 = vrot.lane.b32.xlu0 %v1184, 64
  %v1189 = vpop.permute.xlu0 %1188
  %1190 = vrot.lane.b32.xlu0 %v1185, 64
  %v1191 = vpop.permute.xlu0 %1190
  %v1194 = vmul.f32 %v1157, %v1189
  %v1195 = vmul.f32 %v1159, %v1191
  %1197 = vrot.lane.b32.xlu0 %v1194, 32
  %v1198 = vpop.permute.xlu0 %1197
  %s1200 = scalar_lea.vmem %s6, 48
  %1201 = vst.msk [vmem:[%s1200] sm:$0xff] %vm92, %v1198
  %1203 = vrot.lane.b32.xlu0 %v1195, 32
  %v1204 = vpop.permute.xlu0 %1203
  %s1206 = scalar_lea.vmem %s7, 8
  %1207 = vst.msk [vmem:[%s1206] sm:$0xff] %vm92, %v1204
  %v1208 = vsel %vm92, %v1198, 0
  %v1210 = vsel %vm92, %v1204, 0
  %1212 = vmatprep.subr.mxu0 %v195
  %1213 = vmatpush1.msra.mxu0 %v194
  %1214 = vmatprep.subr.mxu0 %v197
  %1215 = vmatpush1.msra.mxu0 %v196
  %1216 = vmatprep.subr.mxu0 %v199
  %1217 = vmatpush1.msra.mxu0 %v198
  %1218 = vmatprep.subr.mxu0 %v201
  %1219 = vmatpush1.msra.mxu0 %v200
  %1220 = vmatprep.subr.mxu0 0.0
  %1221 = vmatpush1.msra.mxu0 0.0
  %1222 = vmatprep.subr.mxu0 0.0
  %1223 = vmatpush1.msra.mxu0 0.0
  %1224 = vmatprep.subr.mxu0 0.0
  %1225 = vmatpush1.msra.mxu0 0.0
  %1226 = vmatprep.subr.mxu0 0.0
  %1227 = vmatpush1.msra.mxu0 0.0
  %1228 = vmatprep.subr.mxu0 0.0
  %1229 = vmatpush1.msra.mxu0 0.0
  %1230 = vmatprep.subr.mxu0 0.0
  %1231 = vmatpush1.msra.mxu0 0.0
  %1232 = vmatprep.subr.mxu0 0.0
  %1233 = vmatpush1.msra.mxu0 0.0
  %1234 = vmatprep.subr.mxu0 0.0
  %1235 = vmatpush1.msra.mxu0 0.0
  %1236 = vmatprep.subr.mxu0 0.0
  %1237 = vmatpush1.msra.mxu0 0.0
  %1238 = vmatprep.subr.mxu0 0.0
  %1239 = vmatpush1.msra.mxu0 0.0
  %1240 = vmatprep.subr.mxu0 0.0
  %1241 = vmatpush1.msra.mxu0 0.0
  %1242 = vmatprep.subr.mxu0 0.0
  %1243 = vmatpush1.msra.mxu0 0.0
  %1244 = vmatprep.subr.mxu0 0.0
  %1245 = vmatpush1.msra.mxu0 0.0
  %1246 = vmatprep.subr.mxu0 0.0
  %1247 = vmatpush1.msra.mxu0 0.0
  %1248 = vmatprep.subr.mxu0 0.0
  %1249 = vmatpush1.msra.mxu0 0.0
  %1250 = vmatprep.subr.mxu0 0.0
  %1251 = vmatpush1.msra.mxu0 0.0
  %1252 = vmatprep.subr.mxu0 0.0
  %1253 = vmatpush1.msra.mxu0 0.0
  %1254 = vmatprep.subr.mxu0 0.0
  %1255 = vmatpush1.msra.mxu0 0.0
  %1256 = vmatprep.subr.mxu0 0.0
  %1257 = vmatpush1.msra.mxu0 0.0
  %1258 = vmatprep.subr.mxu0 0.0
  %1259 = vmatpush1.msra.mxu0 0.0
  %1260 = vmatprep.subr.mxu0 0.0
  %1261 = vmatpush1.msra.mxu0 0.0
  %1262 = vmatprep.subr.mxu0 0.0
  %1263 = vmatpush1.msra.mxu0 0.0
  %1264 = vmatprep.subr.mxu0 0.0
  %1265 = vmatpush1.msra.mxu0 0.0
  %1266 = vmatprep.subr.mxu0 0.0
  %1267 = vmatpush1.msra.mxu0 0.0
  %1268 = vmatprep.subr.mxu0 0.0
  %1269 = vmatpush1.msra.mxu0 0.0
  %1270 = vmatprep.subr.mxu0 0.0
  %1271 = vmatpush1.msra.mxu0 0.0
  %1272 = vmatprep.subr.mxu0 0.0
  %1273 = vmatpush1.msra.mxu0 0.0
  %1274 = vmatprep.subr.mxu0 0.0
  %1275 = vmatpush1.msra.mxu0 0.0
  %1276 = vmatprep.mubr.f32.mxu0 0.0
  %1277 = vmatmul.mubr.f32.gmra.mrb[0].mxu0 %v1208
  %v1278 = vpop.f32.mrb[0].mxu0
  %v1279 = vadd.f32 0.0, %v1278
  %v1280 = vpop.f32.mrb[0].mxu0
  %1281 = vmatprep.mubr.f32.mxu0 0.0
  %1282 = vmatmul.mubr.f32.gmra.mrb[0].mxu0 %v1210
  %v1283 = vpop.f32.mrb[0].mxu0
  %v1284 = vpop.f32.mrb[0].mxu0
  %v1285 = vadd.f32 0.0, %v1284
  %1286 = vdwg.mxu0
  %v1287 = vld [vmem:[%s282] sm:$0xff]
  %v1288 = vadd.f32 %v1287, %v1279
  %v1289 = vld [vmem:[#allocation2 + $0x8] sm:$0xff]
  %v1290 = vadd.f32 %v1289, %v1285
  %v1291 = vxor.u32 %v1288, 2147483648
  %v1292 = vxor.u32 %v1290, 2147483648
  %v1293 = vmul.f32 %v1291, 1.442695
  %v1294 = vpow.pop %v1293
  %v1295 = vmul.f32 %v1292, 1.442695
  %v1296 = vpow.pop %v1295
  %v1297 = vadd.f32 %v1294, 1.0
  %v1298 = vadd.f32 %v1296, 1.0
  %v1299 = vrcp.pop %v1297
  %v1300 = vmul.f32 1.0, %v1299
  %v1301 = vrcp.pop %v1298
  %v1302 = vmul.f32 1.0, %v1301
  %v1303 = vtanh.pop %v1288
  %v1304 = vtanh.pop %v1290
  %v1305 = vmul.f32 %v1300, %v1182
  %v1306 = vmul.f32 %v1302, %v1183
  %1309 = vrot.lane.b32.xlu0 %v1303, 64
  %v1310 = vpop.permute.xlu0 %1309
  %1311 = vrot.lane.b32.xlu0 %v1304, 64
  %v1312 = vpop.permute.xlu0 %1311
  %v1315 = vmul.f32 %v1300, %v1310
  %v1316 = vmul.f32 %v1302, %v1312
  %1319 = vrot.lane.b32.xlu0 %v1315, 32
  %v1320 = vpop.permute.xlu0 %1319
  %1321 = vrot.lane.b32.xlu0 %v1316, 32
  %v1322 = vpop.permute.xlu0 %1321
  %v1325 = vadd.f32 %v1305, %v1320
  %v1326 = vadd.f32 %v1306, %v1322
  %v1327 = vtanh.pop %v1325
  %v1328 = vtanh.pop %v1326
  %1331 = vrot.lane.b32.xlu0 %v1327, 64
  %v1332 = vpop.permute.xlu0 %1331
  %1333 = vrot.lane.b32.xlu0 %v1328, 64
  %v1334 = vpop.permute.xlu0 %1333
  %v1337 = vmul.f32 %v1300, %v1332
  %v1338 = vmul.f32 %v1302, %v1334
  %1340 = vrot.lane.b32.xlu0 %v1337, 32
  %v1341 = vpop.permute.xlu0 %1340
  %s1343 = scalar_lea.vmem %s6, 56
  %1344 = vst.msk [vmem:[%s1343] sm:$0xff] %vm92, %v1341
  %1346 = vrot.lane.b32.xlu0 %v1338, 32
  %v1347 = vpop.permute.xlu0 %1346
  %1349 = vst.msk [vmem:[%s7] sm:$0xff] %vm92, %v1347
  %1350 = vrot.lane.b32.xlu0 %v1338, 64
  %v1351 = vpop.permute.xlu0 %1350
  %v1353 = vsel %vm92, %v1341, %v1351
  %1355 = vrot.lane.b32.xlu0 %v1325, 96
  %v1356 = vpop.permute.xlu0 %1355
  %v1358 = vsel %vm92, %v1356, %v1326
  %v1359 = vpack.c.bf16 %v1358, %v1353
  %v1360 = vld [vmem:[%s4] sm:$0xf]
  %v1361 = vld [vmem:[%s4 + $0x4] sm:$0xf]
  %v1362 = vld [vmem:[%s4 + $0x8] sm:$0xf]
  %v1363 = vld [vmem:[%s4 + $0xc] sm:$0xf]
  %v1364 = vld [vmem:[%s4 + $0x10] sm:$0xf]
  %v1365 = vld [vmem:[%s4 + $0x14] sm:$0xf]
  %v1366 = vld [vmem:[%s4 + $0x18] sm:$0xf]
  %v1367 = vld [vmem:[%s4 + $0x1c] sm:$0xf]
  %v1368 = vld [vmem:[%s5] sm:$0x1]
  %v1370 = vlaneseq
  %v1371 = vshrl.u32 %v1370, 7
  %v1372 = vsub.s32 0, %v1371
  %v1373 = vrot.slane %v1368, %v1372
  %v1383 = vunpack.c.l.b16 %v1360
  %v1384 = vunpack.c.l.b16 %v1361
  %v1385 = vunpack.c.l.b16 %v1362
  %v1386 = vunpack.c.l.b16 %v1363
  %v1387 = vunpack.c.l.b16 %v1364
  %v1388 = vunpack.c.l.b16 %v1365
  %v1389 = vunpack.c.l.b16 %v1366
  %v1390 = vunpack.c.l.b16 %v1367
  %v1391 = vpack.c.b16 %v1384, %v1383
  %v1392 = vpack.c.b16 %v1386, %v1385
  %v1393 = vpack.c.b16 %v1388, %v1387
  %v1394 = vpack.c.b16 %v1390, %v1389
  %vm1399 = vcmask 523264
  %v1401 = vsel %vm1399, %v1359, 0
  %1403 = vmatprep.subr.bf16.mxu0 0
  %1404 = vmatpush1.bf16.msra.mxu0 %v1391
  %1405 = vmatprep.subr.bf16.mxu0 0
  %1406 = vmatpush1.bf16.msra.mxu0 %v1392
  %1407 = vmatprep.subr.bf16.mxu0 0
  %1408 = vmatpush1.bf16.msra.mxu0 %v1393
  %1409 = vmatprep.subr.bf16.mxu0 0
  %1410 = vmatpush1.bf16.msra.mxu0 %v1394
  %1411 = vmatprep.subr.bf16.mxu0 0
  %1412 = vmatpush1.bf16.msra.mxu0 0
  %1413 = vmatprep.subr.bf16.mxu0 0
  %1414 = vmatpush1.bf16.msra.mxu0 0
  %1415 = vmatprep.subr.bf16.mxu0 0
  %1416 = vmatpush1.bf16.msra.mxu0 0
  %1417 = vmatprep.subr.bf16.mxu0 0
  %1418 = vmatpush1.bf16.msra.mxu0 0
  %1419 = vmatprep.subr.bf16.mxu0 0
  %1420 = vmatpush1.bf16.msra.mxu0 0
  %1421 = vmatprep.subr.bf16.mxu0 0
  %1422 = vmatpush1.bf16.msra.mxu0 0
  %1423 = vmatprep.subr.bf16.mxu0 0
  %1424 = vmatpush1.bf16.msra.mxu0 0
  %1425 = vmatprep.subr.bf16.mxu0 0
  %1426 = vmatpush1.bf16.msra.mxu0 0
  %1427 = vmatprep.subr.bf16.mxu0 0
  %1428 = vmatpush1.bf16.msra.mxu0 0
  %1429 = vmatprep.subr.bf16.mxu0 0
  %1430 = vmatpush1.bf16.msra.mxu0 0
  %1431 = vmatprep.subr.bf16.mxu0 0
  %1432 = vmatpush1.bf16.msra.mxu0 0
  %1433 = vmatprep.subr.bf16.mxu0 0
  %1434 = vmatpush1.bf16.msra.mxu0 0
  %1435 = vmatprep.mubr.bf16.mxu0 0
  %1436 = vmatmul.mubr.bf16.gmra.mrb[0].mxu0 %v1401
  %v1437 = vpop.f32.mrb[0].mxu0
  %v1438 = vadd.f32 %v1373, %v1437
  %v1439 = vpop.f32.mrb[0].mxu0
  %v1440 = vpop.f32.mrb[0].mxu0
  %v1441 = vadd.f32 %v1373, %v1440
  %v1442 = vpop.f32.mrb[0].mxu0
  %1443 = vdwg.mxu0
  %v1444 = vtanh.pop %v1438
  %v1445 = vtanh.pop %v1441
  %1446 = vst.msk [vmem:[%s8] sm:$0xff] %vm92, %v1444
  %1447 = vst.msk [vmem:[%s9] sm:$0xff] %vm92, %v1445
  // Predicated region
  $region26: #{encoder_forward.1} parent=0 // pred_check
    _
  $region27: #{encoder_forward.1} parent=0 // pred_check_branch
    %1449 = sbr.rel (0) target = $region29
  $region28: #{encoder_forward.1} parent=0 // pred_region
    _
  $region29: #{encoder_forward.1} parent=0 // pred_fallthru
    _
  // Predicated region
  $region30: #{encoder_forward.1} parent=0 // pred_check
    _
  $region31: #{encoder_forward.1} parent=0 // pred_check_branch
    %1451 = sbr.rel (0) target = $region33
  $region32: #{encoder_forward.1} parent=0 // pred_region
    _
  $region33: #{encoder_forward.1} parent=0 // pred_fallthru
    _
  // Predicated region
  $region34: #{encoder_forward.1} parent=0 // pred_check
    _
  $region35: #{encoder_forward.1} parent=0 // pred_check_branch
    %1453 = sbr.rel (0) target = $region37
  $region36: #{encoder_forward.1} parent=0 // pred_region
    _
  $region37: #{encoder_forward.1} parent=0 // pred_fallthru
    _
  // Predicated region
  $region38: #{encoder_forward.1} parent=0 // pred_check
    _
  $region39: #{encoder_forward.1} parent=0 // pred_check_branch
    %1455 = sbr.rel (0) target = $region41
  $region40: #{encoder_forward.1} parent=0 // pred_region
    _
  $region41: #{encoder_forward.1} parent=0 // pred_fallthru
    _
  // Predicated region
  $region42: #{encoder_forward.1} parent=0 // pred_check
    _
  $region43: #{encoder_forward.1} parent=0 // pred_check_branch
    %1457 = sbr.rel (0) target = $region45
  $region44: #{encoder_forward.1} parent=0 // pred_region
    _
  $region45: #{encoder_forward.1} parent=0 // pred_fallthru
    _
  // Predicated region
  $region46: #{encoder_forward.1} parent=0 // pred_check
    _
  $region47: #{encoder_forward.1} parent=0 // pred_check_branch
    %1459 = sbr.rel (0) target = $region49
  $region48: #{encoder_forward.1} parent=0 // pred_region
    _
  $region49: #{encoder_forward.1} parent=0 // pred_fallthru
    _
  // Predicated region
  $region50: #{encoder_forward.1} parent=0 // pred_check
    _
  $region51: #{encoder_forward.1} parent=0 // pred_check_branch
    %1461 = sbr.rel (0) target = $region53
  $region52: #{encoder_forward.1} parent=0 // pred_region
    _
  $region53: #{encoder_forward.1} parent=0 // pred_fallthru
    _
  // Predicated region
  $region54: #{encoder_forward.1} parent=0 // pred_check
    _
  $region55: #{encoder_forward.1} parent=0 // pred_check_branch
    %1463 = sbr.rel (0) target = $region57
  $region56: #{encoder_forward.1} parent=0 // pred_region
    _
  $region57: #{encoder_forward.1} parent=0 // pred_fallthru
    _

</llo_original>
